<compile_context>
chip_gen: v7x
topology: tpu7x:2x2x1
jax: 0.10.0
libtpu: 0.0.40
codegen_flags: <defaults>
</compile_context>

<pallas_src>
import math

import jax
import jax.numpy as jnp
from jax.experimental import pallas as pl
from jax.experimental.pallas import tpu as pltpu


LANE = 128        # hidden feature dims padded to a multiple of the 128-wide lane dim
SUBLANE = 8       # batch tiles kept a multiple of 8 sublanes
MAX_BATCH_TILE = 256   # <=256 keeps >=2 blocks at B>=512 (v7x megacore); on
                       # single-TC v5e/v6e one big block would be marginally better.


def _round_up(n, m):
    return ((n + m - 1) // m) * m


def _pick_batch_tile(batch):
    """(tile, padded_batch) with tile % 8 == 0, tile <= ~MAX_BATCH_TILE, minimal pad."""
    num_blocks = max(1, -(-batch // MAX_BATCH_TILE))
    tb = _round_up(-(-batch // num_blocks), SUBLANE)
    return tb, tb * num_blocks


# ----------------------------------------------------------------------------
# Pallas kernel: whole MLP forward for one tile of batch rows.
# ----------------------------------------------------------------------------
def mlp_kernel(x_ref, w_in_ref, b_in_ref, w_hid_ref, b_hid_ref,
               mu1_ref, sig1_ref, ei1_ref, ej1_ref, b1_ref,
               mu2_ref, sig2_ref, ei2_ref, ej2_ref, b2_ref,
               out_ref):
    def silu(v):
        # sigmoid = 1 / (1 + exp(-v)); divide moved to the EUP via approx reciprocal.
        return v * pl.reciprocal(1.0 + jnp.exp(-v), approx=True)

    # input layer + SiLU (f32 accumulate, f32 activation math)
    x = x_ref[...].astype(jnp.bfloat16)
    h = jnp.dot(x, w_in_ref[...], preferred_element_type=jnp.float32) + b_in_ref[...]
    h = silu(h)

    # hidden layer + SiLU
    h = jnp.dot(h.astype(jnp.bfloat16), w_hid_ref[...],
                preferred_element_type=jnp.float32) + b_hid_ref[...]
    h = silu(h)

    # NoisyLinear 1: W = mu + sigma * outer(eps_in, eps_out) (in (in,out) layout),
    # built on the VPU right before the dot -> no HBM materialization per step.
    w1 = (mu1_ref[...].astype(jnp.float32)
          + sig1_ref[...].astype(jnp.float32) * (ei1_ref[...] * ej1_ref[...])
          ).astype(jnp.bfloat16)
    h = jnp.dot(h.astype(jnp.bfloat16), w1,
                preferred_element_type=jnp.float32) + b1_ref[...]
    h = jnp.maximum(h, 0.0)

    # NoisyLinear 2 (output head, narrow N = output_dim)
    w2 = (mu2_ref[...].astype(jnp.float32)
          + sig2_ref[...].astype(jnp.float32) * (ei2_ref[...] * ej2_ref[...])
          ).astype(jnp.bfloat16)
    out_ref[...] = (jnp.dot(h.astype(jnp.bfloat16), w2,
                            preferred_element_type=jnp.float32)
                    + b2_ref[...]).astype(out_ref.dtype)


# ----------------------------------------------------------------------------
# Wrapper: batch tiling, BlockSpecs, cost estimate. Fully jitted.
# ----------------------------------------------------------------------------
@jax.jit
def mlp_forward(x, packed, noise):
    """x: (B, input_dim) f32.  packed: pack_params_for_tpu().  noise: sample_noise()."""
    B, Din = x.shape
    H_p = packed["w_hid"].shape[0]
    Dout = packed["w_mu2"].shape[1]

    TB, B_p = _pick_batch_tile(B)
    grid = (B_p // TB,)

    # Only the batch dim is padded (to a multiple of TB). Feature dims of x and
    # of the output stay at their true widths (last block dim == full array dim).
    x_p = x if B_p == B else jnp.pad(x, ((0, B_p - B), (0, 0)))

    def pad_vec(v, n):
        return v if v.shape[0] == n else jnp.pad(v, (0, n - v.shape[0]))

    eps_i1 = pad_vec(noise["eps_i1"], H_p).reshape(H_p, 1)
    eps_j1 = pad_vec(noise["eps_j1"], H_p).reshape(1, H_p)
    eps_i2 = pad_vec(noise["eps_i2"], H_p).reshape(H_p, 1)
    eps_j2 = noise["eps_j2"].reshape(1, Dout)

    # Effective noisy biases (tiny vectors: cheap fused XLA ops under jit).
    # Padded lanes stay exactly 0 (mu/sigma/eps all zero-padded).
    b1_eff = packed["b_mu1"] + packed["b_sig1"] * eps_j1
    b2_eff = packed["b_mu2"] + packed["b_sig2"] * eps_j2

    def batch_block(shape):
        return pl.BlockSpec(shape, lambda i: (i, 0))

    def resident(shape):
        # Constant index_map: tile stays resident in VMEM across all batch blocks.
        return pl.BlockSpec(shape, lambda i: (0, 0))

    flops = (2 * B_p * (Din * H_p + 2 * H_p * H_p + H_p * Dout)
             + 3 * grid[0] * (H_p * H_p + H_p * Dout))          # in-kernel noisy-W build
    cost = pl.CostEstimate(
        flops=flops,
        transcendentals=2 * B_p * H_p,                           # the two SiLU exps
        bytes_accessed=(4 * B_p * Din + 4 * B_p * Dout
                        + 2 * (Din * H_p + 3 * H_p * H_p + 2 * H_p * Dout)
                        + 4 * (5 * H_p + 3 * Dout)),
    )

    out = pl.pallas_call(
        mlp_kernel,
        out_shape=jax.ShapeDtypeStruct((B_p, Dout), jnp.float32),
        grid=grid,
        in_specs=[
            batch_block((TB, Din)),                          # x
            resident((Din, H_p)),  resident((1, H_p)),       # input layer W, b
            resident((H_p, H_p)),  resident((1, H_p)),       # hidden layer W, b
            resident((H_p, H_p)),  resident((H_p, H_p)),     # noisy1 mu, sigma
            resident((H_p, 1)),    resident((1, H_p)),       # noisy1 eps_in, eps_out
            resident((1, H_p)),                              # noisy1 effective bias
            resident((H_p, Dout)), resident((H_p, Dout)),    # noisy2 mu, sigma
            resident((H_p, 1)),    resident((1, Dout)),      # noisy2 eps_in, eps_out
            resident((1, Dout)),                             # noisy2 effective bias
        ],
        out_specs=batch_block((TB, Dout)),
        compiler_params=pltpu.CompilerParams(
            dimension_semantics=("parallel",),               # batch blocks -> v7x megacore
            vmem_limit_bytes=32 * 1024 * 1024),
        cost_estimate=cost,
    )(x_p,
      packed["w_in"], packed["b_in"],
      packed["w_hid"], packed["b_hid"],
      packed["w_mu1"], packed["w_sig1"], eps_i1, eps_j1, b1_eff,
      packed["w_mu2"], packed["w_sig2"], eps_i2, eps_j2, b2_eff)

    return out if B_p == B else out[:B]


# ----------------------------------------------------------------------------
# Parameter init (PyTorch-equivalent), noise sampling, packing — plain JAX glue.
# ----------------------------------------------------------------------------
def _uniform(key, shape, bound):
    return jax.random.uniform(key, shape, jnp.float32, minval=-bound, maxval=bound)


def _scale_noise(key, size):
    x = jax.random.normal(key, (size,), jnp.float32)
    return jnp.sign(x) * jnp.sqrt(jnp.abs(x))


def make_linear(key, in_f, out_f):
    """nn.Linear default init; returns W shaped (in_f, out_f), b shaped (1, out_f)."""
    k_w, k_b = jax.random.split(key)
    bound = math.sqrt(1.0 / in_f)
    return _uniform(k_w, (out_f, in_f), bound).T, _uniform(k_b, (1, out_f), bound)


def make_noisy_params(key, in_f, out_f, sigma_init=0.5):
    """NoisyLinear mu/sigma; weight tensors stored transposed as (in_f, out_f)."""
    k_w, k_b = jax.random.split(key)
    std = math.sqrt(1.0 / in_f)
    return dict(
        w_mu=_uniform(k_w, (out_f, in_f), std).T,
        b_mu=_uniform(k_b, (1, out_f), std),
        w_sigma=jnp.full((in_f, out_f), sigma_init * std, jnp.float32),
        b_sigma=jnp.full((1, out_f), sigma_init * std, jnp.float32),
    )


def init_mlp_params(key, input_dim, hidden_dim, output_dim):
    k0, k1, k2, k3 = jax.random.split(key, 4)
    w_in, b_in = make_linear(k0, input_dim, hidden_dim)
    w_hid, b_hid = make_linear(k1, hidden_dim, hidden_dim)
    return dict(w_in=w_in, b_in=b_in, w_hid=w_hid, b_hid=b_hid,
                n1=make_noisy_params(k2, hidden_dim, hidden_dim),
                n2=make_noisy_params(k3, hidden_dim, output_dim))


def sample_noise(key, hidden_dim, output_dim):
    """Factorized noise, resampled per forward (mirrors NoisyLinear.reset_noise)."""
    k1i, k1j, k2i, k2j = jax.random.split(key, 4)
    return dict(eps_i1=_scale_noise(k1i, hidden_dim), eps_j1=_scale_noise(k1j, hidden_dim),
                eps_i2=_scale_noise(k2i, hidden_dim), eps_j2=_scale_noise(k2j, output_dim))


def pack_params_for_tpu(params):
    """Canonical kernel-side state (pack ONCE): hidden dims zero-padded to 128 lanes,
    weight matrices bf16 (MXU-native), bias mu/sigma f32. Padded entries are exactly 0
    so the padding is mathematically inert (SiLU(0)=0, ReLU(0)=0)."""
    Din = params["w_in"].shape[0]
    H = params["w_hid"].shape[0]
    Dout = params["n2"]["w_mu"].shape[1]
    H_p = _round_up(H, LANE)

    def pad_w(w, rows, cols):
        out = jnp.zeros((rows, cols), jnp.bfloat16)
        return out.at[:w.shape[0], :w.shape[1]].set(w.astype(jnp.bfloat16))

    def pad_b(b, cols):
        out = jnp.zeros((1, cols), jnp.float32)
        return out.at[:, :b.shape[1]].set(b)

    return dict(
        w_in=pad_w(params["w_in"], Din, H_p),            b_in=pad_b(params["b_in"], H_p),
        w_hid=pad_w(params["w_hid"], H_p, H_p),          b_hid=pad_b(params["b_hid"], H_p),
        w_mu1=pad_w(params["n1"]["w_mu"], H_p, H_p),     w_sig1=pad_w(params["n1"]["w_sigma"], H_p, H_p),
        b_mu1=pad_b(params["n1"]["b_mu"], H_p),          b_sig1=pad_b(params["n1"]["b_sigma"], H_p),
        w_mu2=pad_w(params["n2"]["w_mu"], H_p, Dout),    w_sig2=pad_w(params["n2"]["w_sigma"], H_p, Dout),
        b_mu2=params["n2"]["b_mu"].astype(jnp.float32),  b_sig2=params["n2"]["b_sigma"].astype(jnp.float32),
    )


# ----------------------------------------------------------------------------
# Reference (pure JAX, f32) for sanity check
# ----------------------------------------------------------------------------
def mlp_reference(x, params, noise):
    silu = lambda v: v * jax.nn.sigmoid(v)
    h = silu(x @ params["w_in"] + params["b_in"])
    h = silu(h @ params["w_hid"] + params["b_hid"])
    n1 = params["n1"]
    w1 = n1["w_mu"] + n1["w_sigma"] * jnp.outer(noise["eps_i1"], noise["eps_j1"])
    b1 = n1["b_mu"] + n1["b_sigma"] * noise["eps_j1"][None, :]
    h = jnp.maximum(h @ w1 + b1, 0.0)
    n2 = params["n2"]
    w2 = n2["w_mu"] + n2["w_sigma"] * jnp.outer(noise["eps_i2"], noise["eps_j2"])
    b2 = n2["b_mu"] + n2["b_sigma"] * noise["eps_j2"][None, :]
    return h @ w2 + b2


if __name__ == "__main__":
    key = jax.random.PRNGKey(0)
    k_x, k_p, k_n = jax.random.split(key, 3)

    # Small model dims consistent with the module; batch large enough to give
    # two batch blocks (TB=256 -> grid=(2,)) for the v7x megacore path.
    batch, input_dim, hidden_dim, output_dim = 512, 16, 32, 4
    x = jax.random.normal(k_x, (batch, input_dim), jnp.float32)

    params = init_mlp_params(k_p, input_dim, hidden_dim, output_dim)
    packed = pack_params_for_tpu(params)                 # canonical packed state, built once
    noise = sample_noise(k_n, hidden_dim, output_dim)    # fresh per forward (PyTorch semantics)

    out = mlp_forward(x, packed, noise)
    out = jax.block_until_ready(out)

    ref = mlp_reference(x, params, noise)
    assert out.shape == (batch, output_dim)
    # bf16 mu/sigma/weights (f32 accumulate) + approx-reciprocal sigmoid -> loose tolerance
    # vs the pure-f32 reference.
    assert jnp.allclose(out, ref, atol=3e-2, rtol=3e-2), "mismatch vs reference"

    print("KERNEL_OK")
</pallas_src>

<mosaic_0001>
module attributes {stable_mosaic.version = 11 : i64} {
  func.func @mlp_kernel(%arg0: i32, %arg1: memref<256x16xf32, #tpu.memory_space<vmem>>, %arg2: memref<16x128xbf16, #tpu.memory_space<vmem>>, %arg3: memref<1x128xf32, #tpu.memory_space<vmem>>, %arg4: memref<128x128xbf16, #tpu.memory_space<vmem>>, %arg5: memref<1x128xf32, #tpu.memory_space<vmem>>, %arg6: memref<128x128xbf16, #tpu.memory_space<vmem>>, %arg7: memref<128x128xbf16, #tpu.memory_space<vmem>>, %arg8: memref<128x1xf32, #tpu.memory_space<vmem>>, %arg9: memref<1x128xf32, #tpu.memory_space<vmem>>, %arg10: memref<1x128xf32, #tpu.memory_space<vmem>>, %arg11: memref<128x4xbf16, #tpu.memory_space<vmem>>, %arg12: memref<128x4xbf16, #tpu.memory_space<vmem>>, %arg13: memref<128x1xf32, #tpu.memory_space<vmem>>, %arg14: memref<1x4xf32, #tpu.memory_space<vmem>>, %arg15: memref<1x4xf32, #tpu.memory_space<vmem>>, %arg16: memref<256x4xf32, #tpu.memory_space<vmem>>) attributes {dimension_semantics = [#tpu.dimension_semantics<parallel>], iteration_bounds = array<i64: 2>, scalar_prefetch = 0 : i64, scratch_operands = 0 : i64, tpu.core_type = #tpu.core_type<tc>, window_params = [{transform_indices = @transform_0, window_bounds = array<i64: 256, 16>}, {pipeline_mode = #tpu.pipeline_mode<synchronous>, transform_indices = @transform_1, window_bounds = array<i64: 16, 128>}, {pipeline_mode = #tpu.pipeline_mode<synchronous>, transform_indices = @transform_2, window_bounds = array<i64: 1, 128>}, {pipeline_mode = #tpu.pipeline_mode<synchronous>, transform_indices = @transform_3, window_bounds = array<i64: 128, 128>}, {pipeline_mode = #tpu.pipeline_mode<synchronous>, transform_indices = @transform_4, window_bounds = array<i64: 1, 128>}, {pipeline_mode = #tpu.pipeline_mode<synchronous>, transform_indices = @transform_5, window_bounds = array<i64: 128, 128>}, {pipeline_mode = #tpu.pipeline_mode<synchronous>, transform_indices = @transform_6, window_bounds = array<i64: 128, 128>}, {pipeline_mode = #tpu.pipeline_mode<synchronous>, transform_indices = @transform_7, window_bounds = array<i64: 128, 1>}, {pipeline_mode = #tpu.pipeline_mode<synchronous>, transform_indices = @transform_8, window_bounds = array<i64: 1, 128>}, {pipeline_mode = #tpu.pipeline_mode<synchronous>, transform_indices = @transform_9, window_bounds = array<i64: 1, 128>}, {pipeline_mode = #tpu.pipeline_mode<synchronous>, transform_indices = @transform_10, window_bounds = array<i64: 128, 4>}, {pipeline_mode = #tpu.pipeline_mode<synchronous>, transform_indices = @transform_11, window_bounds = array<i64: 128, 4>}, {pipeline_mode = #tpu.pipeline_mode<synchronous>, transform_indices = @transform_12, window_bounds = array<i64: 128, 1>}, {pipeline_mode = #tpu.pipeline_mode<synchronous>, transform_indices = @transform_13, window_bounds = array<i64: 1, 4>}, {pipeline_mode = #tpu.pipeline_mode<synchronous>, transform_indices = @transform_14, window_bounds = array<i64: 1, 4>}, {transform_indices = @transform_15, window_bounds = array<i64: 256, 4>}]} {
    %c0 = arith.constant 0 : index
    %c0_0 = arith.constant 0 : index
    %0 = vector.load %arg1[%c0, %c0_0] : memref<256x16xf32, #tpu.memory_space<vmem>>, vector<256x16xf32>
    %1 = arith.truncf %0 : vector<256x16xf32> to vector<256x16xbf16>
    %c0_1 = arith.constant 0 : index
    %c0_2 = arith.constant 0 : index
    %2 = vector.load %arg2[%c0_1, %c0_2] : memref<16x128xbf16, #tpu.memory_space<vmem>>, vector<16x128xbf16>
    %cst = arith.constant dense<0.000000e+00> : vector<256x128xf32>
    %3 = tpu.matmul %1, %2, %cst {dimension_numbers = #tpu.dot_dimension_numbers<[1], [0], [0], [1], [0, 0, 1, 1], [], []>} : vector<256x16xbf16>, vector<16x128xbf16>, vector<256x128xf32> -> vector<256x128xf32>
    %c0_3 = arith.constant 0 : index
    %c0_4 = arith.constant 0 : index
    %4 = vector.load %arg3[%c0_3, %c0_4] : memref<1x128xf32, #tpu.memory_space<vmem>>, vector<1x128xf32>
    %5 = vector.broadcast %4 : vector<1x128xf32> to vector<256x128xf32>
    %6 = arith.addf %3, %5 : vector<256x128xf32>
    %cst_5 = arith.constant 0.000000e+00 : f32
    %7 = vector.broadcast %cst_5 : f32 to vector<256x128xf32>
    %8 = arith.subf %7, %6 : vector<256x128xf32>
    %9 = math.exp %8 : vector<256x128xf32>
    %cst_6 = arith.constant 1.000000e+00 : f32
    %10 = vector.broadcast %cst_6 : f32 to vector<256x128xf32>
    %11 = arith.addf %10, %9 : vector<256x128xf32>
    %12 = tpu.reciprocal %11 {approx = true} : vector<256x128xf32> -> vector<256x128xf32>
    %13 = arith.mulf %6, %12 : vector<256x128xf32>
    %14 = arith.truncf %13 : vector<256x128xf32> to vector<256x128xbf16>
    %c0_7 = arith.constant 0 : index
    %c0_8 = arith.constant 0 : index
    %15 = vector.load %arg4[%c0_7, %c0_8] : memref<128x128xbf16, #tpu.memory_space<vmem>>, vector<128x128xbf16>
    %cst_9 = arith.constant dense<0.000000e+00> : vector<256x128xf32>
    %16 = tpu.matmul %14, %15, %cst_9 {dimension_numbers = #tpu.dot_dimension_numbers<[1], [0], [0], [1], [0, 0, 1, 1], [], []>} : vector<256x128xbf16>, vector<128x128xbf16>, vector<256x128xf32> -> vector<256x128xf32>
    %c0_10 = arith.constant 0 : index
    %c0_11 = arith.constant 0 : index
    %17 = vector.load %arg5[%c0_10, %c0_11] : memref<1x128xf32, #tpu.memory_space<vmem>>, vector<1x128xf32>
    %18 = vector.broadcast %17 : vector<1x128xf32> to vector<256x128xf32>
    %19 = arith.addf %16, %18 : vector<256x128xf32>
    %cst_12 = arith.constant 0.000000e+00 : f32
    %20 = vector.broadcast %cst_12 : f32 to vector<256x128xf32>
    %21 = arith.subf %20, %19 : vector<256x128xf32>
    %22 = math.exp %21 : vector<256x128xf32>
    %cst_13 = arith.constant 1.000000e+00 : f32
    %23 = vector.broadcast %cst_13 : f32 to vector<256x128xf32>
    %24 = arith.addf %23, %22 : vector<256x128xf32>
    %25 = tpu.reciprocal %24 {approx = true} : vector<256x128xf32> -> vector<256x128xf32>
    %26 = arith.mulf %19, %25 : vector<256x128xf32>
    %c0_14 = arith.constant 0 : index
    %c0_15 = arith.constant 0 : index
    %27 = vector.load %arg6[%c0_14, %c0_15] : memref<128x128xbf16, #tpu.memory_space<vmem>>, vector<128x128xbf16>
    %28 = arith.extf %27 : vector<128x128xbf16> to vector<128x128xf32>
    %c0_16 = arith.constant 0 : index
    %c0_17 = arith.constant 0 : index
    %29 = vector.load %arg7[%c0_16, %c0_17] : memref<128x128xbf16, #tpu.memory_space<vmem>>, vector<128x128xbf16>
    %30 = arith.extf %29 : vector<128x128xbf16> to vector<128x128xf32>
    %c0_18 = arith.constant 0 : index
    %c0_19 = arith.constant 0 : index
    %31 = vector.load %arg8[%c0_18, %c0_19] : memref<128x1xf32, #tpu.memory_space<vmem>>, vector<128x1xf32>
    %c0_20 = arith.constant 0 : index
    %c0_21 = arith.constant 0 : index
    %32 = vector.load %arg9[%c0_20, %c0_21] : memref<1x128xf32, #tpu.memory_space<vmem>>, vector<1x128xf32>
    %33 = vector.broadcast %31 : vector<128x1xf32> to vector<128x128xf32>
    %34 = vector.broadcast %32 : vector<1x128xf32> to vector<128x128xf32>
    %35 = arith.mulf %33, %34 : vector<128x128xf32>
    %36 = arith.mulf %30, %35 : vector<128x128xf32>
    %37 = arith.addf %28, %36 : vector<128x128xf32>
    %38 = arith.truncf %37 : vector<128x128xf32> to vector<128x128xbf16>
    %39 = arith.truncf %26 : vector<256x128xf32> to vector<256x128xbf16>
    %cst_22 = arith.constant dense<0.000000e+00> : vector<256x128xf32>
    %40 = tpu.matmul %39, %38, %cst_22 {dimension_numbers = #tpu.dot_dimension_numbers<[1], [0], [0], [1], [0, 0, 1, 1], [], []>} : vector<256x128xbf16>, vector<128x128xbf16>, vector<256x128xf32> -> vector<256x128xf32>
    %c0_23 = arith.constant 0 : index
    %c0_24 = arith.constant 0 : index
    %41 = vector.load %arg10[%c0_23, %c0_24] : memref<1x128xf32, #tpu.memory_space<vmem>>, vector<1x128xf32>
    %42 = vector.broadcast %41 : vector<1x128xf32> to vector<256x128xf32>
    %43 = arith.addf %40, %42 : vector<256x128xf32>
    %cst_25 = arith.constant 0.000000e+00 : f32
    %44 = vector.broadcast %cst_25 : f32 to vector<256x128xf32>
    %45 = arith.maximumf %43, %44 : vector<256x128xf32>
    %c0_26 = arith.constant 0 : index
    %c0_27 = arith.constant 0 : index
    %46 = vector.load %arg11[%c0_26, %c0_27] : memref<128x4xbf16, #tpu.memory_space<vmem>>, vector<128x4xbf16>
    %47 = arith.extf %46 : vector<128x4xbf16> to vector<128x4xf32>
    %c0_28 = arith.constant 0 : index
    %c0_29 = arith.constant 0 : index
    %48 = vector.load %arg12[%c0_28, %c0_29] : memref<128x4xbf16, #tpu.memory_space<vmem>>, vector<128x4xbf16>
    %49 = arith.extf %48 : vector<128x4xbf16> to vector<128x4xf32>
    %c0_30 = arith.constant 0 : index
    %c0_31 = arith.constant 0 : index
    %50 = vector.load %arg13[%c0_30, %c0_31] : memref<128x1xf32, #tpu.memory_space<vmem>>, vector<128x1xf32>
    %c0_32 = arith.constant 0 : index
    %c0_33 = arith.constant 0 : index
    %51 = vector.load %arg14[%c0_32, %c0_33] : memref<1x4xf32, #tpu.memory_space<vmem>>, vector<1x4xf32>
    %52 = vector.broadcast %50 : vector<128x1xf32> to vector<128x4xf32>
    %53 = vector.broadcast %51 : vector<1x4xf32> to vector<128x4xf32>
    %54 = arith.mulf %52, %53 : vector<128x4xf32>
    %55 = arith.mulf %49, %54 : vector<128x4xf32>
    %56 = arith.addf %47, %55 : vector<128x4xf32>
    %57 = arith.truncf %56 : vector<128x4xf32> to vector<128x4xbf16>
    %58 = arith.truncf %45 : vector<256x128xf32> to vector<256x128xbf16>
    %cst_34 = arith.constant dense<0.000000e+00> : vector<256x4xf32>
    %59 = tpu.matmul %58, %57, %cst_34 {dimension_numbers = #tpu.dot_dimension_numbers<[1], [0], [0], [1], [0, 0, 1, 1], [], []>} : vector<256x128xbf16>, vector<128x4xbf16>, vector<256x4xf32> -> vector<256x4xf32>
    %c0_35 = arith.constant 0 : index
    %c0_36 = arith.constant 0 : index
    %60 = vector.load %arg15[%c0_35, %c0_36] : memref<1x4xf32, #tpu.memory_space<vmem>>, vector<1x4xf32>
    %61 = vector.broadcast %60 : vector<1x4xf32> to vector<256x4xf32>
    %62 = arith.addf %59, %61 : vector<256x4xf32>
    %c0_37 = arith.constant 0 : index
    %c0_38 = arith.constant 0 : index
    %63 = vector.load %arg16[%c0_37, %c0_38] : memref<256x4xf32, #tpu.memory_space<vmem>>, vector<256x4xf32>
    tpu.vector_store %arg16[%c0_37, %c0_38], %62 {strides = array<i32>} : memref<256x4xf32, #tpu.memory_space<vmem>>, vector<256x4xf32>,
    return
  }
  func.func @transform_0(%arg0: i32) -> (i32, i32) {
    %c0_i32 = arith.constant 0 : i32
    %c0_i32_0 = arith.constant 0 : i32
    return %arg0, %c0_i32 : i32, i32
  }
  func.func @transform_1(%arg0: i32) -> (i32, i32) {
    %c0_i32 = arith.constant 0 : i32
    %c0_i32_0 = arith.constant 0 : i32
    %c0_i32_1 = arith.constant 0 : i32
    return %c0_i32, %c0_i32_0 : i32, i32
  }
  func.func @transform_2(%arg0: i32) -> (i32, i32) {
    %c0_i32 = arith.constant 0 : i32
    %c0_i32_0 = arith.constant 0 : i32
    %c0_i32_1 = arith.constant 0 : i32
    return %c0_i32, %c0_i32_0 : i32, i32
  }
  func.func @transform_3(%arg0: i32) -> (i32, i32) {
    %c0_i32 = arith.constant 0 : i32
    %c0_i32_0 = arith.constant 0 : i32
    %c0_i32_1 = arith.constant 0 : i32
    return %c0_i32, %c0_i32_0 : i32, i32
  }
  func.func @transform_4(%arg0: i32) -> (i32, i32) {
    %c0_i32 = arith.constant 0 : i32
    %c0_i32_0 = arith.constant 0 : i32
    %c0_i32_1 = arith.constant 0 : i32
    return %c0_i32, %c0_i32_0 : i32, i32
  }
  func.func @transform_5(%arg0: i32) -> (i32, i32) {
    %c0_i32 = arith.constant 0 : i32
    %c0_i32_0 = arith.constant 0 : i32
    %c0_i32_1 = arith.constant 0 : i32
    return %c0_i32, %c0_i32_0 : i32, i32
  }
  func.func @transform_6(%arg0: i32) -> (i32, i32) {
    %c0_i32 = arith.constant 0 : i32
    %c0_i32_0 = arith.constant 0 : i32
    %c0_i32_1 = arith.constant 0 : i32
    return %c0_i32, %c0_i32_0 : i32, i32
  }
  func.func @transform_7(%arg0: i32) -> (i32, i32) {
    %c0_i32 = arith.constant 0 : i32
    %c0_i32_0 = arith.constant 0 : i32
    %c0_i32_1 = arith.constant 0 : i32
    return %c0_i32, %c0_i32_0 : i32, i32
  }
  func.func @transform_8(%arg0: i32) -> (i32, i32) {
    %c0_i32 = arith.constant 0 : i32
    %c0_i32_0 = arith.constant 0 : i32
    %c0_i32_1 = arith.constant 0 : i32
    return %c0_i32, %c0_i32_0 : i32, i32
  }
  func.func @transform_9(%arg0: i32) -> (i32, i32) {
    %c0_i32 = arith.constant 0 : i32
    %c0_i32_0 = arith.constant 0 : i32
    %c0_i32_1 = arith.constant 0 : i32
    return %c0_i32, %c0_i32_0 : i32, i32
  }
  func.func @transform_10(%arg0: i32) -> (i32, i32) {
    %c0_i32 = arith.constant 0 : i32
    %c0_i32_0 = arith.constant 0 : i32
    %c0_i32_1 = arith.constant 0 : i32
    return %c0_i32, %c0_i32_0 : i32, i32
  }
  func.func @transform_11(%arg0: i32) -> (i32, i32) {
    %c0_i32 = arith.constant 0 : i32
    %c0_i32_0 = arith.constant 0 : i32
    %c0_i32_1 = arith.constant 0 : i32
    return %c0_i32, %c0_i32_0 : i32, i32
  }
  func.func @transform_12(%arg0: i32) -> (i32, i32) {
    %c0_i32 = arith.constant 0 : i32
    %c0_i32_0 = arith.constant 0 : i32
    %c0_i32_1 = arith.constant 0 : i32
    return %c0_i32, %c0_i32_0 : i32, i32
  }
  func.func @transform_13(%arg0: i32) -> (i32, i32) {
    %c0_i32 = arith.constant 0 : i32
    %c0_i32_0 = arith.constant 0 : i32
    %c0_i32_1 = arith.constant 0 : i32
    return %c0_i32, %c0_i32_0 : i32, i32
  }
  func.func @transform_14(%arg0: i32) -> (i32, i32) {
    %c0_i32 = arith.constant 0 : i32
    %c0_i32_0 = arith.constant 0 : i32
    %c0_i32_1 = arith.constant 0 : i32
    return %c0_i32, %c0_i32_0 : i32, i32
  }
  func.func @transform_15(%arg0: i32) -> (i32, i32) {
    %c0_i32 = arith.constant 0 : i32
    %c0_i32_0 = arith.constant 0 : i32
    return %arg0, %c0_i32 : i32, i32
  }
}

</mosaic_0001>

<llo_original>
// kernel: mlp_forward.1
$region0: #{mlp_forward.1}
  #allocation0 [shape = 'u32[]', space=smem, size = 0x4, offset = 0x4, fixed_abs, tag = 'smem constant byte address 0x4 - core index']
  #allocation1 [shape = 'u32[144,128]{1,0:T(1,128)}', space=vmem, size = 0x12000, scoped, tag = 'internal scratch']
  %s0 = inlined_call_operand.vmem [shape: f32[512,16], index: 0, kind: input, shape index: {}]
  %s1 = inlined_call_operand.vmem [shape: bf16[16,128], index: 1, kind: input, shape index: {}]
  %s2 = inlined_call_operand.vmem [shape: f32[1,128], index: 2, kind: input, shape index: {}]
  %s3 = inlined_call_operand.vmem [shape: bf16[128,128], index: 3, kind: input, shape index: {}]
  %s4 = inlined_call_operand.vmem [shape: f32[1,128], index: 4, kind: input, shape index: {}]
  %s5 = inlined_call_operand.vmem [shape: bf16[128,128], index: 5, kind: input, shape index: {}]
  %s6 = inlined_call_operand.vmem [shape: bf16[128,128], index: 6, kind: input, shape index: {}]
  %s7 = inlined_call_operand.vmem [shape: f32[128,1], index: 7, kind: input, shape index: {}]
  %s8 = inlined_call_operand.vmem [shape: f32[1,128], index: 8, kind: input, shape index: {}]
  %s9 = inlined_call_operand.vmem [shape: f32[1,128], index: 9, kind: input, shape index: {}]
  %s10 = inlined_call_operand.vmem [shape: bf16[128,4], index: 10, kind: input, shape index: {}]
  %s11 = inlined_call_operand.vmem [shape: bf16[128,4], index: 11, kind: input, shape index: {}]
  %s12 = inlined_call_operand.vmem [shape: f32[128,1], index: 12, kind: input, shape index: {}]
  %s13 = inlined_call_operand.vmem [shape: f32[1,4], index: 13, kind: input, shape index: {}]
  %s14 = inlined_call_operand.vmem [shape: f32[1,4], index: 14, kind: input, shape index: {}]
  %s15 = inlined_call_operand.vmem [shape: f32[512,4], index: 15, kind: output, shape index: {}]
  %s16 = sld [smem:[#allocation0]]
  $region93: #{mlp_forward.1} parent=0
    _
  %s18 = ssub.s32 1, %s16
  %s19 = scalar_select 0, %s18, %s16
  loop: start=0, step=1, limit=4
  $region2: #{mlp_forward.1} parent=0 // loop_pre_header
    _
  $region3: #{mlp_forward.1} parent=0 // loop_header
    %s21 = sphi 0, %s25
    %p22 = scmp.ge.s32.totalorder %s21, 4
    %s31 = sphi 0, %s33
    %s34 = sphi 0, %s31
    %s35 = sphi 0, %s34
    %s51 = sphi 0, %s35
    %s55 = sphi 0, %s55
    %s57 = sphi 0, %s55
    %s58 = sphi 0, %s57
    %s72 = sphi 0, %s58
    %s76 = sphi 0, %s76
    %s78 = sphi 0, %s76
    %s79 = sphi 0, %s78
    %s93 = sphi 0, %s79
    %s97 = sphi 0, %s97
    %s99 = sphi 0, %s97
    %s100 = sphi 0, %s99
    %s114 = sphi 0, %s100
    %s118 = sphi 0, %s118
    %s120 = sphi 0, %s118
    %s121 = sphi 0, %s120
    %s135 = sphi 0, %s121
    %s139 = sphi 0, %s139
    %s141 = sphi 0, %s139
    %s142 = sphi 0, %s141
    %s156 = sphi 0, %s142
    %s160 = sphi 0, %s160
    %s162 = sphi 0, %s160
    %s163 = sphi 0, %s162
    %s177 = sphi 0, %s163
    %s181 = sphi 0, %s181
    %s183 = sphi 0, %s181
    %s184 = sphi 0, %s183
    %s198 = sphi 0, %s184
    %s202 = sphi 0, %s202
    %s204 = sphi 0, %s202
    %s205 = sphi 0, %s204
    %s219 = sphi 0, %s205
    %s223 = sphi 0, %s223
    %s225 = sphi 0, %s223
    %s226 = sphi 0, %s225
    %s240 = sphi 0, %s226
    %s244 = sphi 0, %s244
    %s246 = sphi 0, %s244
    %s247 = sphi 0, %s246
    %s261 = sphi 0, %s247
    %s265 = sphi 0, %s265
    %s267 = sphi 0, %s265
    %s268 = sphi 0, %s267
    %s282 = sphi 0, %s268
    %s286 = sphi 0, %s286
    %s288 = sphi 0, %s286
    %s289 = sphi 0, %s288
    %s303 = sphi 0, %s289
    %s307 = sphi 0, %s307
    %s309 = sphi 0, %s307
    %s310 = sphi 0, %s309
    %s324 = sphi 0, %s310
    %s328 = sphi 0, %s328
    %s330 = sphi 0, %s328
    %s331 = sphi 0, %s330
    %s345 = sphi 0, %s331
    %s351 = sphi 0, %s353
    %s354 = sphi 0, %s351
    %s355 = sphi 0, %s354
    %s371 = sphi 0, %s355
  $region4: #{mlp_forward.1} parent=0 // loop_header_branch
    %24 = sbr.rel (%p22) target = $region8
  $region5: #{mlp_forward.1} parent=0 // loop_body
    %s26 = ssub.s32 %s21, 1
    %s27 = ssub.s32 %s21, 2
    %s28 = sadd.s32 %s21, 1
    %s29 = ssub.s32 %s21, %s28
    %p30 = scmp.eq.s32.totalorder %s29, 0
    %s32 = sadd.s32 %s31, 1
    %s33 = scalar_select %p30, %s31, %s32
    %p36 = pneg %p30
    %p37 = scmp.eq.s32.totalorder %s21, 1
    %p38 = por %p36, %p37
    %p39 = scmp.ne.s32.totalorder %s31, %s34
    %p40 = scmp.eq.s32.totalorder %s21, 0
    %p41 = por %p39, %p40
    %p42 = scmp.ne.s32.totalorder %s31, %s34
    %p43 = scmp.eq.s32.totalorder %s26, 1
    %p44 = por %p42, %p43
    %p45 = scmp.ne.s32.totalorder %s34, %s35
    %p46 = scmp.eq.s32.totalorder %s26, 0
    %p47 = por %p45, %p46
    %p48 = scmp.ne.s32.totalorder %s34, %s35
    %p49 = scmp.eq.s32.totalorder %s27, 1
    %p50 = por %p48, %p49
    %p52 = scmp.ne.s32.totalorder %s35, %s51
    %p53 = scmp.eq.s32.totalorder %s27, 0
    %p54 = por %p52, %p53
    %s56 = sadd.s32 %s55, 1
    %p59 = scmp.eq.s32.totalorder %s21, 1
    %p60 = scmp.ne.s32.totalorder %s55, %s57
    %p61 = scmp.eq.s32.totalorder %s21, 0
    %p62 = por %p60, %p61
    %p63 = scmp.ne.s32.totalorder %s55, %s57
    %p64 = scmp.eq.s32.totalorder %s26, 1
    %p65 = por %p63, %p64
    %p66 = scmp.ne.s32.totalorder %s57, %s58
    %p67 = scmp.eq.s32.totalorder %s26, 0
    %p68 = por %p66, %p67
    %p69 = scmp.ne.s32.totalorder %s57, %s58
    %p70 = scmp.eq.s32.totalorder %s27, 1
    %p71 = por %p69, %p70
    %p73 = scmp.ne.s32.totalorder %s58, %s72
    %p74 = scmp.eq.s32.totalorder %s27, 0
    %p75 = por %p73, %p74
    %s77 = sadd.s32 %s76, 1
    %p80 = scmp.eq.s32.totalorder %s21, 1
    %p81 = scmp.ne.s32.totalorder %s76, %s78
    %p82 = scmp.eq.s32.totalorder %s21, 0
    %p83 = por %p81, %p82
    %p84 = scmp.ne.s32.totalorder %s76, %s78
    %p85 = scmp.eq.s32.totalorder %s26, 1
    %p86 = por %p84, %p85
    %p87 = scmp.ne.s32.totalorder %s78, %s79
    %p88 = scmp.eq.s32.totalorder %s26, 0
    %p89 = por %p87, %p88
    %p90 = scmp.ne.s32.totalorder %s78, %s79
    %p91 = scmp.eq.s32.totalorder %s27, 1
    %p92 = por %p90, %p91
    %p94 = scmp.ne.s32.totalorder %s79, %s93
    %p95 = scmp.eq.s32.totalorder %s27, 0
    %p96 = por %p94, %p95
    %s98 = sadd.s32 %s97, 1
    %p101 = scmp.eq.s32.totalorder %s21, 1
    %p102 = scmp.ne.s32.totalorder %s97, %s99
    %p103 = scmp.eq.s32.totalorder %s21, 0
    %p104 = por %p102, %p103
    %p105 = scmp.ne.s32.totalorder %s97, %s99
    %p106 = scmp.eq.s32.totalorder %s26, 1
    %p107 = por %p105, %p106
    %p108 = scmp.ne.s32.totalorder %s99, %s100
    %p109 = scmp.eq.s32.totalorder %s26, 0
    %p110 = por %p108, %p109
    %p111 = scmp.ne.s32.totalorder %s99, %s100
    %p112 = scmp.eq.s32.totalorder %s27, 1
    %p113 = por %p111, %p112
    %p115 = scmp.ne.s32.totalorder %s100, %s114
    %p116 = scmp.eq.s32.totalorder %s27, 0
    %p117 = por %p115, %p116
    %s119 = sadd.s32 %s118, 1
    %p122 = scmp.eq.s32.totalorder %s21, 1
    %p123 = scmp.ne.s32.totalorder %s118, %s120
    %p124 = scmp.eq.s32.totalorder %s21, 0
    %p125 = por %p123, %p124
    %p126 = scmp.ne.s32.totalorder %s118, %s120
    %p127 = scmp.eq.s32.totalorder %s26, 1
    %p128 = por %p126, %p127
    %p129 = scmp.ne.s32.totalorder %s120, %s121
    %p130 = scmp.eq.s32.totalorder %s26, 0
    %p131 = por %p129, %p130
    %p132 = scmp.ne.s32.totalorder %s120, %s121
    %p133 = scmp.eq.s32.totalorder %s27, 1
    %p134 = por %p132, %p133
    %p136 = scmp.ne.s32.totalorder %s121, %s135
    %p137 = scmp.eq.s32.totalorder %s27, 0
    %p138 = por %p136, %p137
    %s140 = sadd.s32 %s139, 1
    %p143 = scmp.eq.s32.totalorder %s21, 1
    %p144 = scmp.ne.s32.totalorder %s139, %s141
    %p145 = scmp.eq.s32.totalorder %s21, 0
    %p146 = por %p144, %p145
    %p147 = scmp.ne.s32.totalorder %s139, %s141
    %p148 = scmp.eq.s32.totalorder %s26, 1
    %p149 = por %p147, %p148
    %p150 = scmp.ne.s32.totalorder %s141, %s142
    %p151 = scmp.eq.s32.totalorder %s26, 0
    %p152 = por %p150, %p151
    %p153 = scmp.ne.s32.totalorder %s141, %s142
    %p154 = scmp.eq.s32.totalorder %s27, 1
    %p155 = por %p153, %p154
    %p157 = scmp.ne.s32.totalorder %s142, %s156
    %p158 = scmp.eq.s32.totalorder %s27, 0
    %p159 = por %p157, %p158
    %s161 = sadd.s32 %s160, 1
    %p164 = scmp.eq.s32.totalorder %s21, 1
    %p165 = scmp.ne.s32.totalorder %s160, %s162
    %p166 = scmp.eq.s32.totalorder %s21, 0
    %p167 = por %p165, %p166
    %p168 = scmp.ne.s32.totalorder %s160, %s162
    %p169 = scmp.eq.s32.totalorder %s26, 1
    %p170 = por %p168, %p169
    %p171 = scmp.ne.s32.totalorder %s162, %s163
    %p172 = scmp.eq.s32.totalorder %s26, 0
    %p173 = por %p171, %p172
    %p174 = scmp.ne.s32.totalorder %s162, %s163
    %p175 = scmp.eq.s32.totalorder %s27, 1
    %p176 = por %p174, %p175
    %p178 = scmp.ne.s32.totalorder %s163, %s177
    %p179 = scmp.eq.s32.totalorder %s27, 0
    %p180 = por %p178, %p179
    %s182 = sadd.s32 %s181, 1
    %p185 = scmp.eq.s32.totalorder %s21, 1
    %p186 = scmp.ne.s32.totalorder %s181, %s183
    %p187 = scmp.eq.s32.totalorder %s21, 0
    %p188 = por %p186, %p187
    %p189 = scmp.ne.s32.totalorder %s181, %s183
    %p190 = scmp.eq.s32.totalorder %s26, 1
    %p191 = por %p189, %p190
    %p192 = scmp.ne.s32.totalorder %s183, %s184
    %p193 = scmp.eq.s32.totalorder %s26, 0
    %p194 = por %p192, %p193
    %p195 = scmp.ne.s32.totalorder %s183, %s184
    %p196 = scmp.eq.s32.totalorder %s27, 1
    %p197 = por %p195, %p196
    %p199 = scmp.ne.s32.totalorder %s184, %s198
    %p200 = scmp.eq.s32.totalorder %s27, 0
    %p201 = por %p199, %p200
    %s203 = sadd.s32 %s202, 1
    %p206 = scmp.eq.s32.totalorder %s21, 1
    %p207 = scmp.ne.s32.totalorder %s202, %s204
    %p208 = scmp.eq.s32.totalorder %s21, 0
    %p209 = por %p207, %p208
    %p210 = scmp.ne.s32.totalorder %s202, %s204
    %p211 = scmp.eq.s32.totalorder %s26, 1
    %p212 = por %p210, %p211
    %p213 = scmp.ne.s32.totalorder %s204, %s205
    %p214 = scmp.eq.s32.totalorder %s26, 0
    %p215 = por %p213, %p214
    %p216 = scmp.ne.s32.totalorder %s204, %s205
    %p217 = scmp.eq.s32.totalorder %s27, 1
    %p218 = por %p216, %p217
    %p220 = scmp.ne.s32.totalorder %s205, %s219
    %p221 = scmp.eq.s32.totalorder %s27, 0
    %p222 = por %p220, %p221
    %s224 = sadd.s32 %s223, 1
    %p227 = scmp.eq.s32.totalorder %s21, 1
    %p228 = scmp.ne.s32.totalorder %s223, %s225
    %p229 = scmp.eq.s32.totalorder %s21, 0
    %p230 = por %p228, %p229
    %p231 = scmp.ne.s32.totalorder %s223, %s225
    %p232 = scmp.eq.s32.totalorder %s26, 1
    %p233 = por %p231, %p232
    %p234 = scmp.ne.s32.totalorder %s225, %s226
    %p235 = scmp.eq.s32.totalorder %s26, 0
    %p236 = por %p234, %p235
    %p237 = scmp.ne.s32.totalorder %s225, %s226
    %p238 = scmp.eq.s32.totalorder %s27, 1
    %p239 = por %p237, %p238
    %p241 = scmp.ne.s32.totalorder %s226, %s240
    %p242 = scmp.eq.s32.totalorder %s27, 0
    %p243 = por %p241, %p242
    %s245 = sadd.s32 %s244, 1
    %p248 = scmp.eq.s32.totalorder %s21, 1
    %p249 = scmp.ne.s32.totalorder %s244, %s246
    %p250 = scmp.eq.s32.totalorder %s21, 0
    %p251 = por %p249, %p250
    %p252 = scmp.ne.s32.totalorder %s244, %s246
    %p253 = scmp.eq.s32.totalorder %s26, 1
    %p254 = por %p252, %p253
    %p255 = scmp.ne.s32.totalorder %s246, %s247
    %p256 = scmp.eq.s32.totalorder %s26, 0
    %p257 = por %p255, %p256
    %p258 = scmp.ne.s32.totalorder %s246, %s247
    %p259 = scmp.eq.s32.totalorder %s27, 1
    %p260 = por %p258, %p259
    %p262 = scmp.ne.s32.totalorder %s247, %s261
    %p263 = scmp.eq.s32.totalorder %s27, 0
    %p264 = por %p262, %p263
    %s266 = sadd.s32 %s265, 1
    %p269 = scmp.eq.s32.totalorder %s21, 1
    %p270 = scmp.ne.s32.totalorder %s265, %s267
    %p271 = scmp.eq.s32.totalorder %s21, 0
    %p272 = por %p270, %p271
    %p273 = scmp.ne.s32.totalorder %s265, %s267
    %p274 = scmp.eq.s32.totalorder %s26, 1
    %p275 = por %p273, %p274
    %p276 = scmp.ne.s32.totalorder %s267, %s268
    %p277 = scmp.eq.s32.totalorder %s26, 0
    %p278 = por %p276, %p277
    %p279 = scmp.ne.s32.totalorder %s267, %s268
    %p280 = scmp.eq.s32.totalorder %s27, 1
    %p281 = por %p279, %p280
    %p283 = scmp.ne.s32.totalorder %s268, %s282
    %p284 = scmp.eq.s32.totalorder %s27, 0
    %p285 = por %p283, %p284
    %s287 = sadd.s32 %s286, 1
    %p290 = scmp.eq.s32.totalorder %s21, 1
    %p291 = scmp.ne.s32.totalorder %s286, %s288
    %p292 = scmp.eq.s32.totalorder %s21, 0
    %p293 = por %p291, %p292
    %p294 = scmp.ne.s32.totalorder %s286, %s288
    %p295 = scmp.eq.s32.totalorder %s26, 1
    %p296 = por %p294, %p295
    %p297 = scmp.ne.s32.totalorder %s288, %s289
    %p298 = scmp.eq.s32.totalorder %s26, 0
    %p299 = por %p297, %p298
    %p300 = scmp.ne.s32.totalorder %s288, %s289
    %p301 = scmp.eq.s32.totalorder %s27, 1
    %p302 = por %p300, %p301
    %p304 = scmp.ne.s32.totalorder %s289, %s303
    %p305 = scmp.eq.s32.totalorder %s27, 0
    %p306 = por %p304, %p305
    %s308 = sadd.s32 %s307, 1
    %p311 = scmp.eq.s32.totalorder %s21, 1
    %p312 = scmp.ne.s32.totalorder %s307, %s309
    %p313 = scmp.eq.s32.totalorder %s21, 0
    %p314 = por %p312, %p313
    %p315 = scmp.ne.s32.totalorder %s307, %s309
    %p316 = scmp.eq.s32.totalorder %s26, 1
    %p317 = por %p315, %p316
    %p318 = scmp.ne.s32.totalorder %s309, %s310
    %p319 = scmp.eq.s32.totalorder %s26, 0
    %p320 = por %p318, %p319
    %p321 = scmp.ne.s32.totalorder %s309, %s310
    %p322 = scmp.eq.s32.totalorder %s27, 1
    %p323 = por %p321, %p322
    %p325 = scmp.ne.s32.totalorder %s310, %s324
    %p326 = scmp.eq.s32.totalorder %s27, 0
    %p327 = por %p325, %p326
    %s329 = sadd.s32 %s328, 1
    %p332 = scmp.eq.s32.totalorder %s21, 1
    %p333 = scmp.ne.s32.totalorder %s328, %s330
    %p334 = scmp.eq.s32.totalorder %s21, 0
    %p335 = por %p333, %p334
    %p336 = scmp.ne.s32.totalorder %s328, %s330
    %p337 = scmp.eq.s32.totalorder %s26, 1
    %p338 = por %p336, %p337
    %p339 = scmp.ne.s32.totalorder %s330, %s331
    %p340 = scmp.eq.s32.totalorder %s26, 0
    %p341 = por %p339, %p340
    %p342 = scmp.ne.s32.totalorder %s330, %s331
    %p343 = scmp.eq.s32.totalorder %s27, 1
    %p344 = por %p342, %p343
    %p346 = scmp.ne.s32.totalorder %s331, %s345
    %p347 = scmp.eq.s32.totalorder %s27, 0
    %p348 = por %p346, %p347
    %s349 = ssub.s32 %s21, %s28
    %p350 = scmp.eq.s32.totalorder %s349, 0
    %s352 = sadd.s32 %s351, 1
    %s353 = scalar_select %p350, %s351, %s352
    %p356 = pneg %p350
    %p357 = scmp.eq.s32.totalorder %s21, 1
    %p358 = por %p356, %p357
    %p359 = scmp.ne.s32.totalorder %s351, %s354
    %p360 = scmp.eq.s32.totalorder %s21, 0
    %p361 = por %p359, %p360
    %p362 = scmp.ne.s32.totalorder %s351, %s354
    %p363 = scmp.eq.s32.totalorder %s26, 1
    %p364 = por %p362, %p363
    %p365 = scmp.ne.s32.totalorder %s354, %s355
    %p366 = scmp.eq.s32.totalorder %s26, 0
    %p367 = por %p365, %p366
    %p368 = scmp.ne.s32.totalorder %s354, %s355
    %p369 = scmp.eq.s32.totalorder %s27, 1
    %p370 = por %p368, %p369
    %p372 = scmp.ne.s32.totalorder %s355, %s371
    %p373 = scmp.eq.s32.totalorder %s27, 0
    %p374 = por %p372, %p373
    %p375 = scmp.le.s32.totalorder 1, %s21
    %p376 = scmp.lt.s32.totalorder %s21, 3
    %p377 = pnand %p375, %p376
    %p378 = pneg %p377
    // Predicated region
    $region9: #{mlp_forward.1} parent=5 // pred_check
      _
    $region10: #{mlp_forward.1} parent=5 // pred_check_branch
      %380 = sbr.rel (%p377) target = $region12
    $region11: #{mlp_forward.1} parent=5 // pred_region
      %s381 = ssub.s32 %s21, 1
      // Predicated region
      $region13: #{mlp_forward.1} parent=11 // pred_check
        %p382 = pneg %p68
      $region14: #{mlp_forward.1} parent=11 // pred_check_branch
        %384 = sbr.rel (%p382) target = $region16
      $region15: #{mlp_forward.1} parent=11 // pred_region
        _
      $region16: #{mlp_forward.1} parent=11 // pred_fallthru
        _
      // Predicated region
      $region17: #{mlp_forward.1} parent=11 // pred_check
        %p385 = pneg %p89
      $region18: #{mlp_forward.1} parent=11 // pred_check_branch
        %387 = sbr.rel (%p385) target = $region20
      $region19: #{mlp_forward.1} parent=11 // pred_region
        _
      $region20: #{mlp_forward.1} parent=11 // pred_fallthru
        _
      // Predicated region
      $region21: #{mlp_forward.1} parent=11 // pred_check
        %p388 = pneg %p110
      $region22: #{mlp_forward.1} parent=11 // pred_check_branch
        %390 = sbr.rel (%p388) target = $region24
      $region23: #{mlp_forward.1} parent=11 // pred_region
        _
      $region24: #{mlp_forward.1} parent=11 // pred_fallthru
        _
      // Predicated region
      $region25: #{mlp_forward.1} parent=11 // pred_check
        %p391 = pneg %p131
      $region26: #{mlp_forward.1} parent=11 // pred_check_branch
        %393 = sbr.rel (%p391) target = $region28
      $region27: #{mlp_forward.1} parent=11 // pred_region
        _
      $region28: #{mlp_forward.1} parent=11 // pred_fallthru
        _
      // Predicated region
      $region29: #{mlp_forward.1} parent=11 // pred_check
        %p394 = pneg %p152
      $region30: #{mlp_forward.1} parent=11 // pred_check_branch
        %396 = sbr.rel (%p394) target = $region32
      $region31: #{mlp_forward.1} parent=11 // pred_region
        _
      $region32: #{mlp_forward.1} parent=11 // pred_fallthru
        _
      // Predicated region
      $region33: #{mlp_forward.1} parent=11 // pred_check
        %p397 = pneg %p173
      $region34: #{mlp_forward.1} parent=11 // pred_check_branch
        %399 = sbr.rel (%p397) target = $region36
      $region35: #{mlp_forward.1} parent=11 // pred_region
        _
      $region36: #{mlp_forward.1} parent=11 // pred_fallthru
        _
      // Predicated region
      $region37: #{mlp_forward.1} parent=11 // pred_check
        %p400 = pneg %p194
      $region38: #{mlp_forward.1} parent=11 // pred_check_branch
        %402 = sbr.rel (%p400) target = $region40
      $region39: #{mlp_forward.1} parent=11 // pred_region
        _
      $region40: #{mlp_forward.1} parent=11 // pred_fallthru
        _
      // Predicated region
      $region41: #{mlp_forward.1} parent=11 // pred_check
        %p403 = pneg %p215
      $region42: #{mlp_forward.1} parent=11 // pred_check_branch
        %405 = sbr.rel (%p403) target = $region44
      $region43: #{mlp_forward.1} parent=11 // pred_region
        _
      $region44: #{mlp_forward.1} parent=11 // pred_fallthru
        _
      // Predicated region
      $region45: #{mlp_forward.1} parent=11 // pred_check
        %p406 = pneg %p236
      $region46: #{mlp_forward.1} parent=11 // pred_check_branch
        %408 = sbr.rel (%p406) target = $region48
      $region47: #{mlp_forward.1} parent=11 // pred_region
        _
      $region48: #{mlp_forward.1} parent=11 // pred_fallthru
        _
      // Predicated region
      $region49: #{mlp_forward.1} parent=11 // pred_check
        %p409 = pneg %p257
      $region50: #{mlp_forward.1} parent=11 // pred_check_branch
        %411 = sbr.rel (%p409) target = $region52
      $region51: #{mlp_forward.1} parent=11 // pred_region
        _
      $region52: #{mlp_forward.1} parent=11 // pred_fallthru
        _
      // Predicated region
      $region53: #{mlp_forward.1} parent=11 // pred_check
        %p412 = pneg %p278
      $region54: #{mlp_forward.1} parent=11 // pred_check_branch
        %414 = sbr.rel (%p412) target = $region56
      $region55: #{mlp_forward.1} parent=11 // pred_region
        _
      $region56: #{mlp_forward.1} parent=11 // pred_fallthru
        _
      // Predicated region
      $region57: #{mlp_forward.1} parent=11 // pred_check
        %p415 = pneg %p299
      $region58: #{mlp_forward.1} parent=11 // pred_check_branch
        %417 = sbr.rel (%p415) target = $region60
      $region59: #{mlp_forward.1} parent=11 // pred_region
        _
      $region60: #{mlp_forward.1} parent=11 // pred_fallthru
        _
      // Predicated region
      $region61: #{mlp_forward.1} parent=11 // pred_check
        %p418 = pneg %p320
      $region62: #{mlp_forward.1} parent=11 // pred_check_branch
        %420 = sbr.rel (%p418) target = $region64
      $region63: #{mlp_forward.1} parent=11 // pred_region
        _
      $region64: #{mlp_forward.1} parent=11 // pred_fallthru
        _
      // Predicated region
      $region65: #{mlp_forward.1} parent=11 // pred_check
        %p421 = pneg %p341
      $region66: #{mlp_forward.1} parent=11 // pred_check_branch
        %423 = sbr.rel (%p421) target = $region68
      $region67: #{mlp_forward.1} parent=11 // pred_region
        _
      $region68: #{mlp_forward.1} parent=11 // pred_fallthru
        _
    $region12: #{mlp_forward.1} parent=5 // pred_fallthru
      _
    %p424 = scmp.lt.s32.totalorder %s21, 2
    // Predicated region
    $region69: #{mlp_forward.1} parent=5 // pred_check
      %p425 = pneg %p424
    $region70: #{mlp_forward.1} parent=5 // pred_check_branch
      %427 = sbr.rel (%p425) target = $region72
    $region71: #{mlp_forward.1} parent=5 // pred_region
      // Predicated region
      $region73: #{mlp_forward.1} parent=71 // pred_check
        %p428 = pneg %p41
      $region74: #{mlp_forward.1} parent=71 // pred_check_branch
        %430 = sbr.rel (%p428) target = $region76
      $region75: #{mlp_forward.1} parent=71 // pred_region
        %s431 = smul.u32 32, %s21
        %p432 = scmp.lt.s32.totalorder %s431, 63
        %s433 = scalar_select %p432, %s431, 63
        %s434 = smul.addr %s433, 8
        %s435 = scalar_lea.vmem %s0, %s434
        %s436 = smul.u32 32, %s21
      $region76: #{mlp_forward.1} parent=71 // pred_fallthru
        _
    $region72: #{mlp_forward.1} parent=5 // pred_fallthru
      _
    %p437 = scmp.le.s32.totalorder 1, %s21
    %p438 = scmp.lt.s32.totalorder %s21, 3
    %p439 = pnand %p437, %p438
    %p440 = pneg %p439
    // Predicated region
    $region77: #{mlp_forward.1} parent=5 // pred_check
      _
    $region78: #{mlp_forward.1} parent=5 // pred_check_branch
      %442 = sbr.rel (%p439) target = $region80
    $region79: #{mlp_forward.1} parent=5 // pred_region
      %s443 = ssub.s32 %s21, 1
      %s444 = smul.u32 32, %s26
      %p445 = scmp.lt.s32.totalorder %s444, 63
      %s446 = scalar_select %p445, %s444, 63
      %s447 = smul.addr %s446, 8
      %s448 = scalar_lea.vmem %s0, %s447
      %p449 = pneg %p47
      %p450 = pneg %p44
      %p451 = pneg %p68
      %p452 = pneg %p65
      %p453 = pneg %p89
      %p454 = pneg %p86
      %p455 = pneg %p110
      %p456 = pneg %p107
      %p457 = pneg %p131
      %p458 = pneg %p128
      %p459 = pneg %p152
      %p460 = pneg %p149
      %p461 = pneg %p173
      %p462 = pneg %p170
      %p463 = pneg %p194
      %p464 = pneg %p191
      %p465 = pneg %p215
      %p466 = pneg %p212
      %p467 = pneg %p236
      %p468 = pneg %p233
      %p469 = pneg %p257
      %p470 = pneg %p254
      %p471 = pneg %p278
      %p472 = pneg %p275
      %p473 = pneg %p299
      %p474 = pneg %p296
      %p475 = pneg %p320
      %p476 = pneg %p317
      %p477 = pneg %p341
      %p478 = pneg %p338
      %p479 = pneg %p367
      %p480 = pneg %p364
      %s481 = smul.u32 32, %s26
      %p482 = scmp.lt.s32.totalorder %s481, 63
      %s483 = scalar_select %p482, %s481, 63
      %s484 = smul.addr %s483, 8
      %s485 = scalar_lea.vmem %s15, %s484
      %s486 = smul.u32 32, %s26
      %p487 = scmp.lt.s32.totalorder %s486, 63
      %s488 = scalar_select %p487, %s486, 63
      %s489 = smul.addr %s488, 8
      %s490 = scalar_lea.vmem %s0, %s489
      %s491 = smul.u32 32, %s26
      %s492 = smul.u32 32, %s26
      %p493 = scmp.lt.s32.totalorder %s492, 63
      %s494 = scalar_select %p493, %s492, 63
      %s495 = smul.addr %s494, 8
      %s496 = scalar_lea.vmem %s15, %s495
      %s497 = smul.u32 32, %s26
      %v499 = vld [vmem:[%s490] sm:$0xff]
      %v500 = vld [vmem:[%s490 + $0x8] sm:$0xff]
      %v501 = vld [vmem:[%s490 + $0x10] sm:$0xff]
      %v502 = vld [vmem:[%s490 + $0x18] sm:$0xff]
      %v503 = vld [vmem:[%s490 + $0x20] sm:$0xff]
      %v504 = vld [vmem:[%s490 + $0x28] sm:$0xff]
      %v505 = vld [vmem:[%s490 + $0x30] sm:$0xff]
      %v506 = vld [vmem:[%s490 + $0x38] sm:$0xff]
      %v507 = vld [vmem:[%s490 + $0x40] sm:$0xff]
      %v508 = vld [vmem:[%s490 + $0x48] sm:$0xff]
      %v509 = vld [vmem:[%s490 + $0x50] sm:$0xff]
      %v510 = vld [vmem:[%s490 + $0x58] sm:$0xff]
      %v511 = vld [vmem:[%s490 + $0x60] sm:$0xff]
      %v512 = vld [vmem:[%s490 + $0x68] sm:$0xff]
      %v513 = vld [vmem:[%s490 + $0x70] sm:$0xff]
      %v514 = vld [vmem:[%s490 + $0x78] sm:$0xff]
      %v515 = vld [vmem:[%s490 + $0x80] sm:$0xff]
      %v516 = vld [vmem:[%s490 + $0x88] sm:$0xff]
      %v517 = vld [vmem:[%s490 + $0x90] sm:$0xff]
      %v518 = vld [vmem:[%s490 + $0x98] sm:$0xff]
      %v519 = vld [vmem:[%s490 + $0xa0] sm:$0xff]
      %v520 = vld [vmem:[%s490 + $0xa8] sm:$0xff]
      %v521 = vld [vmem:[%s490 + $0xb0] sm:$0xff]
      %v522 = vld [vmem:[%s490 + $0xb8] sm:$0xff]
      %v523 = vld [vmem:[%s490 + $0xc0] sm:$0xff]
      %v524 = vld [vmem:[%s490 + $0xc8] sm:$0xff]
      %v525 = vld [vmem:[%s490 + $0xd0] sm:$0xff]
      %v526 = vld [vmem:[%s490 + $0xd8] sm:$0xff]
      %v527 = vld [vmem:[%s490 + $0xe0] sm:$0xff]
      %v528 = vld [vmem:[%s490 + $0xe8] sm:$0xff]
      %v529 = vld [vmem:[%s490 + $0xf0] sm:$0xff]
      %v530 = vld [vmem:[%s490 + $0xf8] sm:$0xff]
      %v531 = vpack.c.bf16 %v500, %v499
      %v532 = vpack.c.bf16 %v502, %v501
      %v533 = vpack.c.bf16 %v504, %v503
      %v534 = vpack.c.bf16 %v506, %v505
      %v535 = vpack.c.bf16 %v508, %v507
      %v536 = vpack.c.bf16 %v510, %v509
      %v537 = vpack.c.bf16 %v512, %v511
      %v538 = vpack.c.bf16 %v514, %v513
      %v539 = vpack.c.bf16 %v516, %v515
      %v540 = vpack.c.bf16 %v518, %v517
      %v541 = vpack.c.bf16 %v520, %v519
      %v542 = vpack.c.bf16 %v522, %v521
      %v543 = vpack.c.bf16 %v524, %v523
      %v544 = vpack.c.bf16 %v526, %v525
      %v545 = vpack.c.bf16 %v528, %v527
      %v546 = vpack.c.bf16 %v530, %v529
      %v547 = vld [vmem:[%s1] sm:$0xf]
      %v548 = vld [vmem:[%s1 + $0x4] sm:$0xf]
      %v549 = vld [vmem:[%s2] sm:$0x1]
      %v551 = vlaneseq
      %v552 = vshrl.u32 %v551, 7
      %v553 = vsub.s32 0, %v552
      %v554 = vrot.slane %v549, %v553
      %v558 = vunpack.c.l.b16 %v547
      %v559 = vunpack.c.l.b16 %v548
      %v560 = vpack.c.b16 %v559, %v558
      %vm562 = vcmask 130048
      %v564 = vsel %vm562, %v531, 0
      %v567 = vsel %vm562, %v532, 0
      %v570 = vsel %vm562, %v533, 0
      %v573 = vsel %vm562, %v534, 0
      %v576 = vsel %vm562, %v535, 0
      %v579 = vsel %vm562, %v536, 0
      %v582 = vsel %vm562, %v537, 0
      %v585 = vsel %vm562, %v538, 0
      %v588 = vsel %vm562, %v539, 0
      %v591 = vsel %vm562, %v540, 0
      %v594 = vsel %vm562, %v541, 0
      %v597 = vsel %vm562, %v542, 0
      %v600 = vsel %vm562, %v543, 0
      %v603 = vsel %vm562, %v544, 0
      %v606 = vsel %vm562, %v545, 0
      %v609 = vsel %vm562, %v546, 0
      %611 = vmatprep.subr.bf16.mxu0 0
      %612 = vmatpush1.bf16.msra.mxu0 %v560
      %613 = vmatprep.subr.bf16.mxu0 0
      %614 = vmatpush1.bf16.msra.mxu0 0
      %615 = vmatprep.subr.bf16.mxu0 0
      %616 = vmatpush1.bf16.msra.mxu0 0
      %617 = vmatprep.subr.bf16.mxu0 0
      %618 = vmatpush1.bf16.msra.mxu0 0
      %619 = vmatprep.subr.bf16.mxu0 0
      %620 = vmatpush1.bf16.msra.mxu0 0
      %621 = vmatprep.subr.bf16.mxu0 0
      %622 = vmatpush1.bf16.msra.mxu0 0
      %623 = vmatprep.subr.bf16.mxu0 0
      %624 = vmatpush1.bf16.msra.mxu0 0
      %625 = vmatprep.subr.bf16.mxu0 0
      %626 = vmatpush1.bf16.msra.mxu0 0
      %627 = vmatprep.subr.bf16.mxu0 0
      %628 = vmatpush1.bf16.msra.mxu0 0
      %629 = vmatprep.subr.bf16.mxu0 0
      %630 = vmatpush1.bf16.msra.mxu0 0
      %631 = vmatprep.subr.bf16.mxu0 0
      %632 = vmatpush1.bf16.msra.mxu0 0
      %633 = vmatprep.subr.bf16.mxu0 0
      %634 = vmatpush1.bf16.msra.mxu0 0
      %635 = vmatprep.subr.bf16.mxu0 0
      %636 = vmatpush1.bf16.msra.mxu0 0
      %637 = vmatprep.subr.bf16.mxu0 0
      %638 = vmatpush1.bf16.msra.mxu0 0
      %639 = vmatprep.subr.bf16.mxu0 0
      %640 = vmatpush1.bf16.msra.mxu0 0
      %641 = vmatprep.subr.bf16.mxu0 0
      %642 = vmatpush1.bf16.msra.mxu0 0
      %643 = vmatprep.mubr.bf16.mxu0 0
      %644 = vmatmul.mubr.bf16.gmra.mrb[0].mxu0 %v564
      %v645 = vpop.f32.mrb[0].mxu0
      %v646 = vadd.f32 %v554, %v645
      %v647 = vpop.f32.mrb[0].mxu0
      %v648 = vpop.f32.mrb[0].mxu0
      %v649 = vadd.f32 %v554, %v648
      %v650 = vpop.f32.mrb[0].mxu0
      %651 = vmatprep.mubr.bf16.mxu0 0
      %652 = vmatmul.mubr.bf16.gmra.mrb[0].mxu0 %v567
      %v653 = vpop.f32.mrb[0].mxu0
      %v654 = vadd.f32 %v554, %v653
      %v655 = vpop.f32.mrb[0].mxu0
      %v656 = vpop.f32.mrb[0].mxu0
      %v657 = vadd.f32 %v554, %v656
      %v658 = vpop.f32.mrb[0].mxu0
      %659 = vmatprep.mubr.bf16.mxu0 0
      %660 = vmatmul.mubr.bf16.gmra.mrb[0].mxu0 %v570
      %v661 = vpop.f32.mrb[0].mxu0
      %v662 = vadd.f32 %v554, %v661
      %v663 = vpop.f32.mrb[0].mxu0
      %v664 = vpop.f32.mrb[0].mxu0
      %v665 = vadd.f32 %v554, %v664
      %v666 = vpop.f32.mrb[0].mxu0
      %667 = vmatprep.mubr.bf16.mxu0 0
      %668 = vmatmul.mubr.bf16.gmra.mrb[0].mxu0 %v573
      %v669 = vpop.f32.mrb[0].mxu0
      %v670 = vadd.f32 %v554, %v669
      %v671 = vpop.f32.mrb[0].mxu0
      %v672 = vpop.f32.mrb[0].mxu0
      %v673 = vadd.f32 %v554, %v672
      %v674 = vpop.f32.mrb[0].mxu0
      %675 = vmatprep.mubr.bf16.mxu0 0
      %676 = vmatmul.mubr.bf16.gmra.mrb[0].mxu0 %v576
      %v677 = vpop.f32.mrb[0].mxu0
      %v678 = vadd.f32 %v554, %v677
      %v679 = vpop.f32.mrb[0].mxu0
      %v680 = vpop.f32.mrb[0].mxu0
      %v681 = vadd.f32 %v554, %v680
      %v682 = vpop.f32.mrb[0].mxu0
      %683 = vmatprep.mubr.bf16.mxu0 0
      %684 = vmatmul.mubr.bf16.gmra.mrb[0].mxu0 %v579
      %v685 = vpop.f32.mrb[0].mxu0
      %v686 = vadd.f32 %v554, %v685
      %v687 = vpop.f32.mrb[0].mxu0
      %v688 = vpop.f32.mrb[0].mxu0
      %v689 = vadd.f32 %v554, %v688
      %v690 = vpop.f32.mrb[0].mxu0
      %691 = vmatprep.mubr.bf16.mxu0 0
      %692 = vmatmul.mubr.bf16.gmra.mrb[0].mxu0 %v582
      %v693 = vpop.f32.mrb[0].mxu0
      %v694 = vadd.f32 %v554, %v693
      %v695 = vpop.f32.mrb[0].mxu0
      %v696 = vpop.f32.mrb[0].mxu0
      %v697 = vadd.f32 %v554, %v696
      %v698 = vpop.f32.mrb[0].mxu0
      %699 = vmatprep.mubr.bf16.mxu0 0
      %700 = vmatmul.mubr.bf16.gmra.mrb[0].mxu0 %v585
      %v701 = vpop.f32.mrb[0].mxu0
      %v702 = vadd.f32 %v554, %v701
      %v703 = vpop.f32.mrb[0].mxu0
      %v704 = vpop.f32.mrb[0].mxu0
      %v705 = vadd.f32 %v554, %v704
      %v706 = vpop.f32.mrb[0].mxu0
      %707 = vmatprep.mubr.bf16.mxu0 0
      %708 = vmatmul.mubr.bf16.gmra.mrb[0].mxu0 %v588
      %v709 = vpop.f32.mrb[0].mxu0
      %v710 = vadd.f32 %v554, %v709
      %v711 = vpop.f32.mrb[0].mxu0
      %v712 = vpop.f32.mrb[0].mxu0
      %v713 = vadd.f32 %v554, %v712
      %v714 = vpop.f32.mrb[0].mxu0
      %715 = vmatprep.mubr.bf16.mxu0 0
      %716 = vmatmul.mubr.bf16.gmra.mrb[0].mxu0 %v591
      %v717 = vpop.f32.mrb[0].mxu0
      %v718 = vadd.f32 %v554, %v717
      %v719 = vpop.f32.mrb[0].mxu0
      %v720 = vpop.f32.mrb[0].mxu0
      %v721 = vadd.f32 %v554, %v720
      %v722 = vpop.f32.mrb[0].mxu0
      %723 = vmatprep.mubr.bf16.mxu0 0
      %724 = vmatmul.mubr.bf16.gmra.mrb[0].mxu0 %v594
      %v725 = vpop.f32.mrb[0].mxu0
      %v726 = vadd.f32 %v554, %v725
      %v727 = vpop.f32.mrb[0].mxu0
      %v728 = vpop.f32.mrb[0].mxu0
      %v729 = vadd.f32 %v554, %v728
      %v730 = vpop.f32.mrb[0].mxu0
      %731 = vmatprep.mubr.bf16.mxu0 0
      %732 = vmatmul.mubr.bf16.gmra.mrb[0].mxu0 %v597
      %v733 = vpop.f32.mrb[0].mxu0
      %v734 = vadd.f32 %v554, %v733
      %v735 = vpop.f32.mrb[0].mxu0
      %v736 = vpop.f32.mrb[0].mxu0
      %v737 = vadd.f32 %v554, %v736
      %v738 = vpop.f32.mrb[0].mxu0
      %739 = vmatprep.mubr.bf16.mxu0 0
      %740 = vmatmul.mubr.bf16.gmra.mrb[0].mxu0 %v600
      %v741 = vpop.f32.mrb[0].mxu0
      %v742 = vadd.f32 %v554, %v741
      %v743 = vpop.f32.mrb[0].mxu0
      %v744 = vpop.f32.mrb[0].mxu0
      %v745 = vadd.f32 %v554, %v744
      %v746 = vpop.f32.mrb[0].mxu0
      %747 = vmatprep.mubr.bf16.mxu0 0
      %748 = vmatmul.mubr.bf16.gmra.mrb[0].mxu0 %v603
      %v749 = vpop.f32.mrb[0].mxu0
      %v750 = vadd.f32 %v554, %v749
      %v751 = vpop.f32.mrb[0].mxu0
      %v752 = vpop.f32.mrb[0].mxu0
      %v753 = vadd.f32 %v554, %v752
      %v754 = vpop.f32.mrb[0].mxu0
      %755 = vmatprep.mubr.bf16.mxu0 0
      %756 = vmatmul.mubr.bf16.gmra.mrb[0].mxu0 %v606
      %v757 = vpop.f32.mrb[0].mxu0
      %v758 = vadd.f32 %v554, %v757
      %v759 = vpop.f32.mrb[0].mxu0
      %v760 = vpop.f32.mrb[0].mxu0
      %v761 = vadd.f32 %v554, %v760
      %v762 = vpop.f32.mrb[0].mxu0
      %763 = vmatprep.mubr.bf16.mxu0 0
      %764 = vmatmul.mubr.bf16.gmra.mrb[0].mxu0 %v609
      %v765 = vpop.f32.mrb[0].mxu0
      %v766 = vadd.f32 %v554, %v765
      %v767 = vpop.f32.mrb[0].mxu0
      %v768 = vpop.f32.mrb[0].mxu0
      %v769 = vadd.f32 %v554, %v768
      %v770 = vpop.f32.mrb[0].mxu0
      %771 = vdwg.mxu0
      %v772 = vsub.f32 0.0, %v646
      %v773 = vsub.f32 0.0, %v649
      %v774 = vsub.f32 0.0, %v654
      %v775 = vsub.f32 0.0, %v657
      %v776 = vsub.f32 0.0, %v662
      %v777 = vsub.f32 0.0, %v665
      %v778 = vsub.f32 0.0, %v670
      %v779 = vsub.f32 0.0, %v673
      %v780 = vsub.f32 0.0, %v678
      %v781 = vsub.f32 0.0, %v681
      %v782 = vsub.f32 0.0, %v686
      %v783 = vsub.f32 0.0, %v689
      %v784 = vsub.f32 0.0, %v694
      %v785 = vsub.f32 0.0, %v697
      %v786 = vsub.f32 0.0, %v702
      %v787 = vsub.f32 0.0, %v705
      %v788 = vsub.f32 0.0, %v710
      %v789 = vsub.f32 0.0, %v713
      %v790 = vsub.f32 0.0, %v718
      %v791 = vsub.f32 0.0, %v721
      %v792 = vsub.f32 0.0, %v726
      %v793 = vsub.f32 0.0, %v729
      %v794 = vsub.f32 0.0, %v734
      %v795 = vsub.f32 0.0, %v737
      %v796 = vsub.f32 0.0, %v742
      %v797 = vsub.f32 0.0, %v745
      %v798 = vsub.f32 0.0, %v750
      %v799 = vsub.f32 0.0, %v753
      %v800 = vsub.f32 0.0, %v758
      %v801 = vsub.f32 0.0, %v761
      %v802 = vsub.f32 0.0, %v766
      %v803 = vsub.f32 0.0, %v769
      %v804 = vmul.f32 %v772, 1.442695
      %v805 = vpow.pop %v804
      %v806 = vmul.f32 %v773, 1.442695
      %v807 = vpow.pop %v806
      %v808 = vmul.f32 %v774, 1.442695
      %v809 = vpow.pop %v808
      %v810 = vmul.f32 %v775, 1.442695
      %v811 = vpow.pop %v810
      %v812 = vmul.f32 %v776, 1.442695
      %v813 = vpow.pop %v812
      %v814 = vmul.f32 %v777, 1.442695
      %v815 = vpow.pop %v814
      %v816 = vmul.f32 %v778, 1.442695
      %v817 = vpow.pop %v816
      %v818 = vmul.f32 %v779, 1.442695
      %v819 = vpow.pop %v818
      %v820 = vmul.f32 %v780, 1.442695
      %v821 = vpow.pop %v820
      %v822 = vmul.f32 %v781, 1.442695
      %v823 = vpow.pop %v822
      %v824 = vmul.f32 %v782, 1.442695
      %v825 = vpow.pop %v824
      %v826 = vmul.f32 %v783, 1.442695
      %v827 = vpow.pop %v826
      %v828 = vmul.f32 %v784, 1.442695
      %v829 = vpow.pop %v828
      %v830 = vmul.f32 %v785, 1.442695
      %v831 = vpow.pop %v830
      %v832 = vmul.f32 %v786, 1.442695
      %v833 = vpow.pop %v832
      %v834 = vmul.f32 %v787, 1.442695
      %v835 = vpow.pop %v834
      %v836 = vmul.f32 %v788, 1.442695
      %v837 = vpow.pop %v836
      %v838 = vmul.f32 %v789, 1.442695
      %v839 = vpow.pop %v838
      %v840 = vmul.f32 %v790, 1.442695
      %v841 = vpow.pop %v840
      %v842 = vmul.f32 %v791, 1.442695
      %v843 = vpow.pop %v842
      %v844 = vmul.f32 %v792, 1.442695
      %v845 = vpow.pop %v844
      %v846 = vmul.f32 %v793, 1.442695
      %v847 = vpow.pop %v846
      %v848 = vmul.f32 %v794, 1.442695
      %v849 = vpow.pop %v848
      %v850 = vmul.f32 %v795, 1.442695
      %v851 = vpow.pop %v850
      %v852 = vmul.f32 %v796, 1.442695
      %v853 = vpow.pop %v852
      %v854 = vmul.f32 %v797, 1.442695
      %v855 = vpow.pop %v854
      %v856 = vmul.f32 %v798, 1.442695
      %v857 = vpow.pop %v856
      %v858 = vmul.f32 %v799, 1.442695
      %v859 = vpow.pop %v858
      %v860 = vmul.f32 %v800, 1.442695
      %v861 = vpow.pop %v860
      %v862 = vmul.f32 %v801, 1.442695
      %v863 = vpow.pop %v862
      %v864 = vmul.f32 %v802, 1.442695
      %v865 = vpow.pop %v864
      %v866 = vmul.f32 %v803, 1.442695
      %v867 = vpow.pop %v866
      %v868 = vadd.f32 %v805, 1.0
      %v869 = vadd.f32 %v807, 1.0
      %v870 = vadd.f32 %v809, 1.0
      %v871 = vadd.f32 %v811, 1.0
      %v872 = vadd.f32 %v813, 1.0
      %v873 = vadd.f32 %v815, 1.0
      %v874 = vadd.f32 %v817, 1.0
      %v875 = vadd.f32 %v819, 1.0
      %v876 = vadd.f32 %v821, 1.0
      %v877 = vadd.f32 %v823, 1.0
      %v878 = vadd.f32 %v825, 1.0
      %v879 = vadd.f32 %v827, 1.0
      %v880 = vadd.f32 %v829, 1.0
      %v881 = vadd.f32 %v831, 1.0
      %v882 = vadd.f32 %v833, 1.0
      %v883 = vadd.f32 %v835, 1.0
      %v884 = vadd.f32 %v837, 1.0
      %v885 = vadd.f32 %v839, 1.0
      %v886 = vadd.f32 %v841, 1.0
      %v887 = vadd.f32 %v843, 1.0
      %v888 = vadd.f32 %v845, 1.0
      %v889 = vadd.f32 %v847, 1.0
      %v890 = vadd.f32 %v849, 1.0
      %v891 = vadd.f32 %v851, 1.0
      %v892 = vadd.f32 %v853, 1.0
      %v893 = vadd.f32 %v855, 1.0
      %v894 = vadd.f32 %v857, 1.0
      %v895 = vadd.f32 %v859, 1.0
      %v896 = vadd.f32 %v861, 1.0
      %v897 = vadd.f32 %v863, 1.0
      %v898 = vadd.f32 %v865, 1.0
      %v899 = vadd.f32 %v867, 1.0
      %v900 = vrcp.pop %v868
      %v901 = vrcp.pop %v869
      %v902 = vrcp.pop %v870
      %v903 = vrcp.pop %v871
      %v904 = vrcp.pop %v872
      %v905 = vrcp.pop %v873
      %v906 = vrcp.pop %v874
      %v907 = vrcp.pop %v875
      %v908 = vrcp.pop %v876
      %v909 = vrcp.pop %v877
      %v910 = vrcp.pop %v878
      %v911 = vrcp.pop %v879
      %v912 = vrcp.pop %v880
      %v913 = vrcp.pop %v881
      %v914 = vrcp.pop %v882
      %v915 = vrcp.pop %v883
      %v916 = vrcp.pop %v884
      %v917 = vrcp.pop %v885
      %v918 = vrcp.pop %v886
      %v919 = vrcp.pop %v887
      %v920 = vrcp.pop %v888
      %v921 = vrcp.pop %v889
      %v922 = vrcp.pop %v890
      %v923 = vrcp.pop %v891
      %v924 = vrcp.pop %v892
      %v925 = vrcp.pop %v893
      %v926 = vrcp.pop %v894
      %v927 = vrcp.pop %v895
      %v928 = vrcp.pop %v896
      %v929 = vrcp.pop %v897
      %v930 = vrcp.pop %v898
      %v931 = vrcp.pop %v899
      %v932 = vmul.f32 %v646, %v900
      %v933 = vmul.f32 %v649, %v901
      %v934 = vmul.f32 %v654, %v902
      %v935 = vmul.f32 %v657, %v903
      %v936 = vmul.f32 %v662, %v904
      %v937 = vmul.f32 %v665, %v905
      %v938 = vmul.f32 %v670, %v906
      %v939 = vmul.f32 %v673, %v907
      %v940 = vmul.f32 %v678, %v908
      %v941 = vmul.f32 %v681, %v909
      %v942 = vmul.f32 %v686, %v910
      %v943 = vmul.f32 %v689, %v911
      %v944 = vmul.f32 %v694, %v912
      %v945 = vmul.f32 %v697, %v913
      %v946 = vmul.f32 %v702, %v914
      %v947 = vmul.f32 %v705, %v915
      %v948 = vmul.f32 %v710, %v916
      %v949 = vmul.f32 %v713, %v917
      %v950 = vmul.f32 %v718, %v918
      %v951 = vmul.f32 %v721, %v919
      %v952 = vmul.f32 %v726, %v920
      %v953 = vmul.f32 %v729, %v921
      %v954 = vmul.f32 %v734, %v922
      %v955 = vmul.f32 %v737, %v923
      %v956 = vmul.f32 %v742, %v924
      %v957 = vmul.f32 %v745, %v925
      %v958 = vmul.f32 %v750, %v926
      %v959 = vmul.f32 %v753, %v927
      %v960 = vmul.f32 %v758, %v928
      %v961 = vmul.f32 %v761, %v929
      %v962 = vmul.f32 %v766, %v930
      %v963 = vmul.f32 %v769, %v931
      %v964 = vpack.c.bf16 %v933, %v932
      %v965 = vpack.c.bf16 %v935, %v934
      %v966 = vpack.c.bf16 %v937, %v936
      %v967 = vpack.c.bf16 %v939, %v938
      %v968 = vpack.c.bf16 %v941, %v940
      %v969 = vpack.c.bf16 %v943, %v942
      %v970 = vpack.c.bf16 %v945, %v944
      %v971 = vpack.c.bf16 %v947, %v946
      %v972 = vpack.c.bf16 %v949, %v948
      %v973 = vpack.c.bf16 %v951, %v950
      %v974 = vpack.c.bf16 %v953, %v952
      %v975 = vpack.c.bf16 %v955, %v954
      %v976 = vpack.c.bf16 %v957, %v956
      %v977 = vpack.c.bf16 %v959, %v958
      %v978 = vpack.c.bf16 %v961, %v960
      %v979 = vpack.c.bf16 %v963, %v962
      %v980 = vld [vmem:[%s3] sm:$0xf]
      %v981 = vld [vmem:[%s3 + $0x4] sm:$0xf]
      %v982 = vld [vmem:[%s3 + $0x8] sm:$0xf]
      %v983 = vld [vmem:[%s3 + $0xc] sm:$0xf]
      %v984 = vld [vmem:[%s3 + $0x10] sm:$0xf]
      %v985 = vld [vmem:[%s3 + $0x14] sm:$0xf]
      %v986 = vld [vmem:[%s3 + $0x18] sm:$0xf]
      %v987 = vld [vmem:[%s3 + $0x1c] sm:$0xf]
      %v988 = vld [vmem:[%s3 + $0x20] sm:$0xf]
      %v989 = vld [vmem:[%s3 + $0x24] sm:$0xf]
      %v990 = vld [vmem:[%s3 + $0x28] sm:$0xf]
      %v991 = vld [vmem:[%s3 + $0x2c] sm:$0xf]
      %v992 = vld [vmem:[%s3 + $0x30] sm:$0xf]
      %v993 = vld [vmem:[%s3 + $0x34] sm:$0xf]
      %v994 = vld [vmem:[%s3 + $0x38] sm:$0xf]
      %v995 = vld [vmem:[%s3 + $0x3c] sm:$0xf]
      %v996 = vld [vmem:[%s4] sm:$0x1]
      %v998 = vlaneseq
      %v999 = vshrl.u32 %v998, 7
      %v1000 = vsub.s32 0, %v999
      %v1001 = vrot.slane %v996, %v1000
      %v1019 = vunpack.c.l.b16 %v980
      %v1020 = vunpack.c.l.b16 %v981
      %v1021 = vunpack.c.l.b16 %v982
      %v1022 = vunpack.c.l.b16 %v983
      %v1023 = vunpack.c.l.b16 %v984
      %v1024 = vunpack.c.l.b16 %v985
      %v1025 = vunpack.c.l.b16 %v986
      %v1026 = vunpack.c.l.b16 %v987
      %v1027 = vunpack.c.l.b16 %v988
      %v1028 = vunpack.c.l.b16 %v989
      %v1029 = vunpack.c.l.b16 %v990
      %v1030 = vunpack.c.l.b16 %v991
      %v1031 = vunpack.c.l.b16 %v992
      %v1032 = vunpack.c.l.b16 %v993
      %v1033 = vunpack.c.l.b16 %v994
      %v1034 = vunpack.c.l.b16 %v995
      %v1035 = vpack.c.b16 %v1020, %v1019
      %v1036 = vpack.c.b16 %v1022, %v1021
      %v1037 = vpack.c.b16 %v1024, %v1023
      %v1038 = vpack.c.b16 %v1026, %v1025
      %v1039 = vpack.c.b16 %v1028, %v1027
      %v1040 = vpack.c.b16 %v1030, %v1029
      %v1041 = vpack.c.b16 %v1032, %v1031
      %v1042 = vpack.c.b16 %v1034, %v1033
      %1051 = vmatprep.subr.bf16.mxu0 0
      %1052 = vmatpush1.bf16.msra.mxu0 %v1035
      %1053 = vmatprep.subr.bf16.mxu0 0
      %1054 = vmatpush1.bf16.msra.mxu0 %v1036
      %1055 = vmatprep.subr.bf16.mxu0 0
      %1056 = vmatpush1.bf16.msra.mxu0 %v1037
      %1057 = vmatprep.subr.bf16.mxu0 0
      %1058 = vmatpush1.bf16.msra.mxu0 %v1038
      %1059 = vmatprep.subr.bf16.mxu0 0
      %1060 = vmatpush1.bf16.msra.mxu0 %v1039
      %1061 = vmatprep.subr.bf16.mxu0 0
      %1062 = vmatpush1.bf16.msra.mxu0 %v1040
      %1063 = vmatprep.subr.bf16.mxu0 0
      %1064 = vmatpush1.bf16.msra.mxu0 %v1041
      %1065 = vmatprep.subr.bf16.mxu0 0
      %1066 = vmatpush1.bf16.msra.mxu0 %v1042
      %1067 = vmatprep.subr.bf16.mxu0 0
      %1068 = vmatpush1.bf16.msra.mxu0 0
      %1069 = vmatprep.subr.bf16.mxu0 0
      %1070 = vmatpush1.bf16.msra.mxu0 0
      %1071 = vmatprep.subr.bf16.mxu0 0
      %1072 = vmatpush1.bf16.msra.mxu0 0
      %1073 = vmatprep.subr.bf16.mxu0 0
      %1074 = vmatpush1.bf16.msra.mxu0 0
      %1075 = vmatprep.subr.bf16.mxu0 0
      %1076 = vmatpush1.bf16.msra.mxu0 0
      %1077 = vmatprep.subr.bf16.mxu0 0
      %1078 = vmatpush1.bf16.msra.mxu0 0
      %1079 = vmatprep.subr.bf16.mxu0 0
      %1080 = vmatpush1.bf16.msra.mxu0 0
      %1081 = vmatprep.subr.bf16.mxu0 0
      %1082 = vmatpush1.bf16.msra.mxu0 0
      %1083 = vmatprep.mubr.bf16.mxu0 0
      %1084 = vmatmul.mubr.bf16.gmra.mrb[0].mxu0 %v964
      %v1085 = vpop.f32.mrb[0].mxu0
      %v1086 = vadd.f32 %v1001, %v1085
      %v1087 = vpop.f32.mrb[0].mxu0
      %v1088 = vpop.f32.mrb[0].mxu0
      %v1089 = vadd.f32 %v1001, %v1088
      %v1090 = vpop.f32.mrb[0].mxu0
      %1091 = vmatprep.mubr.bf16.mxu0 0
      %1092 = vmatmul.mubr.bf16.gmra.mrb[0].mxu0 %v965
      %v1093 = vpop.f32.mrb[0].mxu0
      %v1094 = vadd.f32 %v1001, %v1093
      %v1095 = vpop.f32.mrb[0].mxu0
      %v1096 = vpop.f32.mrb[0].mxu0
      %v1097 = vadd.f32 %v1001, %v1096
      %v1098 = vpop.f32.mrb[0].mxu0
      %1099 = vmatprep.mubr.bf16.mxu0 0
      %1100 = vmatmul.mubr.bf16.gmra.mrb[0].mxu0 %v966
      %v1101 = vpop.f32.mrb[0].mxu0
      %v1102 = vadd.f32 %v1001, %v1101
      %v1103 = vpop.f32.mrb[0].mxu0
      %v1104 = vpop.f32.mrb[0].mxu0
      %v1105 = vadd.f32 %v1001, %v1104
      %v1106 = vpop.f32.mrb[0].mxu0
      %1107 = vmatprep.mubr.bf16.mxu0 0
      %1108 = vmatmul.mubr.bf16.gmra.mrb[0].mxu0 %v967
      %v1109 = vpop.f32.mrb[0].mxu0
      %v1110 = vadd.f32 %v1001, %v1109
      %v1111 = vpop.f32.mrb[0].mxu0
      %v1112 = vpop.f32.mrb[0].mxu0
      %v1113 = vadd.f32 %v1001, %v1112
      %v1114 = vpop.f32.mrb[0].mxu0
      %1115 = vmatprep.mubr.bf16.mxu0 0
      %1116 = vmatmul.mubr.bf16.gmra.mrb[0].mxu0 %v968
      %v1117 = vpop.f32.mrb[0].mxu0
      %v1118 = vadd.f32 %v1001, %v1117
      %v1119 = vpop.f32.mrb[0].mxu0
      %v1120 = vpop.f32.mrb[0].mxu0
      %v1121 = vadd.f32 %v1001, %v1120
      %v1122 = vpop.f32.mrb[0].mxu0
      %1123 = vmatprep.mubr.bf16.mxu0 0
      %1124 = vmatmul.mubr.bf16.gmra.mrb[0].mxu0 %v969
      %v1125 = vpop.f32.mrb[0].mxu0
      %v1126 = vadd.f32 %v1001, %v1125
      %v1127 = vpop.f32.mrb[0].mxu0
      %v1128 = vpop.f32.mrb[0].mxu0
      %v1129 = vadd.f32 %v1001, %v1128
      %v1130 = vpop.f32.mrb[0].mxu0
      %1131 = vmatprep.mubr.bf16.mxu0 0
      %1132 = vmatmul.mubr.bf16.gmra.mrb[0].mxu0 %v970
      %v1133 = vpop.f32.mrb[0].mxu0
      %v1134 = vadd.f32 %v1001, %v1133
      %v1135 = vpop.f32.mrb[0].mxu0
      %v1136 = vpop.f32.mrb[0].mxu0
      %v1137 = vadd.f32 %v1001, %v1136
      %v1138 = vpop.f32.mrb[0].mxu0
      %1139 = vmatprep.mubr.bf16.mxu0 0
      %1140 = vmatmul.mubr.bf16.gmra.mrb[0].mxu0 %v971
      %v1141 = vpop.f32.mrb[0].mxu0
      %v1142 = vadd.f32 %v1001, %v1141
      %v1143 = vpop.f32.mrb[0].mxu0
      %v1144 = vpop.f32.mrb[0].mxu0
      %v1145 = vadd.f32 %v1001, %v1144
      %v1146 = vpop.f32.mrb[0].mxu0
      %1147 = vmatprep.mubr.bf16.mxu0 0
      %1148 = vmatmul.mubr.bf16.gmra.mrb[0].mxu0 %v972
      %v1149 = vpop.f32.mrb[0].mxu0
      %v1150 = vadd.f32 %v1001, %v1149
      %v1151 = vpop.f32.mrb[0].mxu0
      %v1152 = vpop.f32.mrb[0].mxu0
      %v1153 = vadd.f32 %v1001, %v1152
      %v1154 = vpop.f32.mrb[0].mxu0
      %1155 = vmatprep.mubr.bf16.mxu0 0
      %1156 = vmatmul.mubr.bf16.gmra.mrb[0].mxu0 %v973
      %v1157 = vpop.f32.mrb[0].mxu0
      %v1158 = vadd.f32 %v1001, %v1157
      %v1159 = vpop.f32.mrb[0].mxu0
      %v1160 = vpop.f32.mrb[0].mxu0
      %v1161 = vadd.f32 %v1001, %v1160
      %v1162 = vpop.f32.mrb[0].mxu0
      %1163 = vmatprep.mubr.bf16.mxu0 0
      %1164 = vmatmul.mubr.bf16.gmra.mrb[0].mxu0 %v974
      %v1165 = vpop.f32.mrb[0].mxu0
      %v1166 = vadd.f32 %v1001, %v1165
      %v1167 = vpop.f32.mrb[0].mxu0
      %v1168 = vpop.f32.mrb[0].mxu0
      %v1169 = vadd.f32 %v1001, %v1168
      %v1170 = vpop.f32.mrb[0].mxu0
      %1171 = vmatprep.mubr.bf16.mxu0 0
      %1172 = vmatmul.mubr.bf16.gmra.mrb[0].mxu0 %v975
      %v1173 = vpop.f32.mrb[0].mxu0
      %v1174 = vadd.f32 %v1001, %v1173
      %v1175 = vpop.f32.mrb[0].mxu0
      %v1176 = vpop.f32.mrb[0].mxu0
      %v1177 = vadd.f32 %v1001, %v1176
      %v1178 = vpop.f32.mrb[0].mxu0
      %1179 = vmatprep.mubr.bf16.mxu0 0
      %1180 = vmatmul.mubr.bf16.gmra.mrb[0].mxu0 %v976
      %v1181 = vpop.f32.mrb[0].mxu0
      %v1182 = vadd.f32 %v1001, %v1181
      %v1183 = vpop.f32.mrb[0].mxu0
      %v1184 = vpop.f32.mrb[0].mxu0
      %v1185 = vadd.f32 %v1001, %v1184
      %v1186 = vpop.f32.mrb[0].mxu0
      %1187 = vmatprep.mubr.bf16.mxu0 0
      %1188 = vmatmul.mubr.bf16.gmra.mrb[0].mxu0 %v977
      %v1189 = vpop.f32.mrb[0].mxu0
      %v1190 = vadd.f32 %v1001, %v1189
      %v1191 = vpop.f32.mrb[0].mxu0
      %v1192 = vpop.f32.mrb[0].mxu0
      %v1193 = vadd.f32 %v1001, %v1192
      %v1194 = vpop.f32.mrb[0].mxu0
      %1195 = vmatprep.mubr.bf16.mxu0 0
      %1196 = vmatmul.mubr.bf16.gmra.mrb[0].mxu0 %v978
      %v1197 = vpop.f32.mrb[0].mxu0
      %v1198 = vadd.f32 %v1001, %v1197
      %v1199 = vpop.f32.mrb[0].mxu0
      %v1200 = vpop.f32.mrb[0].mxu0
      %v1201 = vadd.f32 %v1001, %v1200
      %v1202 = vpop.f32.mrb[0].mxu0
      %1203 = vmatprep.mubr.bf16.mxu0 0
      %1204 = vmatmul.mubr.bf16.gmra.mrb[0].mxu0 %v979
      %v1205 = vpop.f32.mrb[0].mxu0
      %v1206 = vadd.f32 %v1001, %v1205
      %v1207 = vpop.f32.mrb[0].mxu0
      %v1208 = vpop.f32.mrb[0].mxu0
      %v1209 = vadd.f32 %v1001, %v1208
      %v1210 = vpop.f32.mrb[0].mxu0
      %1211 = vdwg.mxu0
      %v1212 = vsub.f32 0.0, %v1086
      %v1213 = vsub.f32 0.0, %v1089
      %v1214 = vsub.f32 0.0, %v1094
      %v1215 = vsub.f32 0.0, %v1097
      %v1216 = vsub.f32 0.0, %v1102
      %v1217 = vsub.f32 0.0, %v1105
      %v1218 = vsub.f32 0.0, %v1110
      %v1219 = vsub.f32 0.0, %v1113
      %v1220 = vsub.f32 0.0, %v1118
      %v1221 = vsub.f32 0.0, %v1121
      %v1222 = vsub.f32 0.0, %v1126
      %v1223 = vsub.f32 0.0, %v1129
      %v1224 = vsub.f32 0.0, %v1134
      %v1225 = vsub.f32 0.0, %v1137
      %v1226 = vsub.f32 0.0, %v1142
      %v1227 = vsub.f32 0.0, %v1145
      %v1228 = vsub.f32 0.0, %v1150
      %v1229 = vsub.f32 0.0, %v1153
      %v1230 = vsub.f32 0.0, %v1158
      %v1231 = vsub.f32 0.0, %v1161
      %v1232 = vsub.f32 0.0, %v1166
      %v1233 = vsub.f32 0.0, %v1169
      %v1234 = vsub.f32 0.0, %v1174
      %v1235 = vsub.f32 0.0, %v1177
      %v1236 = vsub.f32 0.0, %v1182
      %v1237 = vsub.f32 0.0, %v1185
      %v1238 = vsub.f32 0.0, %v1190
      %v1239 = vsub.f32 0.0, %v1193
      %v1240 = vsub.f32 0.0, %v1198
      %v1241 = vsub.f32 0.0, %v1201
      %v1242 = vsub.f32 0.0, %v1206
      %v1243 = vsub.f32 0.0, %v1209
      %v1244 = vmul.f32 %v1212, 1.442695
      %v1245 = vpow.pop %v1244
      %v1246 = vmul.f32 %v1213, 1.442695
      %v1247 = vpow.pop %v1246
      %v1248 = vmul.f32 %v1214, 1.442695
      %v1249 = vpow.pop %v1248
      %v1250 = vmul.f32 %v1215, 1.442695
      %v1251 = vpow.pop %v1250
      %v1252 = vmul.f32 %v1216, 1.442695
      %v1253 = vpow.pop %v1252
      %v1254 = vmul.f32 %v1217, 1.442695
      %v1255 = vpow.pop %v1254
      %v1256 = vmul.f32 %v1218, 1.442695
      %v1257 = vpow.pop %v1256
      %v1258 = vmul.f32 %v1219, 1.442695
      %v1259 = vpow.pop %v1258
      %v1260 = vmul.f32 %v1220, 1.442695
      %v1261 = vpow.pop %v1260
      %v1262 = vmul.f32 %v1221, 1.442695
      %v1263 = vpow.pop %v1262
      %v1264 = vmul.f32 %v1222, 1.442695
      %v1265 = vpow.pop %v1264
      %v1266 = vmul.f32 %v1223, 1.442695
      %v1267 = vpow.pop %v1266
      %v1268 = vmul.f32 %v1224, 1.442695
      %v1269 = vpow.pop %v1268
      %v1270 = vmul.f32 %v1225, 1.442695
      %v1271 = vpow.pop %v1270
      %v1272 = vmul.f32 %v1226, 1.442695
      %v1273 = vpow.pop %v1272
      %v1274 = vmul.f32 %v1227, 1.442695
      %v1275 = vpow.pop %v1274
      %v1276 = vmul.f32 %v1228, 1.442695
      %v1277 = vpow.pop %v1276
      %v1278 = vmul.f32 %v1229, 1.442695
      %v1279 = vpow.pop %v1278
      %v1280 = vmul.f32 %v1230, 1.442695
      %v1281 = vpow.pop %v1280
      %v1282 = vmul.f32 %v1231, 1.442695
      %v1283 = vpow.pop %v1282
      %v1284 = vmul.f32 %v1232, 1.442695
      %v1285 = vpow.pop %v1284
      %v1286 = vmul.f32 %v1233, 1.442695
      %v1287 = vpow.pop %v1286
      %v1288 = vmul.f32 %v1234, 1.442695
      %v1289 = vpow.pop %v1288
      %v1290 = vmul.f32 %v1235, 1.442695
      %v1291 = vpow.pop %v1290
      %v1292 = vmul.f32 %v1236, 1.442695
      %v1293 = vpow.pop %v1292
      %v1294 = vmul.f32 %v1237, 1.442695
      %v1295 = vpow.pop %v1294
      %v1296 = vmul.f32 %v1238, 1.442695
      %v1297 = vpow.pop %v1296
      %v1298 = vmul.f32 %v1239, 1.442695
      %v1299 = vpow.pop %v1298
      %v1300 = vmul.f32 %v1240, 1.442695
      %v1301 = vpow.pop %v1300
      %v1302 = vmul.f32 %v1241, 1.442695
      %v1303 = vpow.pop %v1302
      %v1304 = vmul.f32 %v1242, 1.442695
      %v1305 = vpow.pop %v1304
      %v1306 = vmul.f32 %v1243, 1.442695
      %v1307 = vpow.pop %v1306
      %v1308 = vadd.f32 %v1245, 1.0
      %v1309 = vadd.f32 %v1247, 1.0
      %v1310 = vadd.f32 %v1249, 1.0
      %v1311 = vadd.f32 %v1251, 1.0
      %v1312 = vadd.f32 %v1253, 1.0
      %v1313 = vadd.f32 %v1255, 1.0
      %v1314 = vadd.f32 %v1257, 1.0
      %v1315 = vadd.f32 %v1259, 1.0
      %v1316 = vadd.f32 %v1261, 1.0
      %v1317 = vadd.f32 %v1263, 1.0
      %v1318 = vadd.f32 %v1265, 1.0
      %v1319 = vadd.f32 %v1267, 1.0
      %v1320 = vadd.f32 %v1269, 1.0
      %v1321 = vadd.f32 %v1271, 1.0
      %v1322 = vadd.f32 %v1273, 1.0
      %v1323 = vadd.f32 %v1275, 1.0
      %v1324 = vadd.f32 %v1277, 1.0
      %v1325 = vadd.f32 %v1279, 1.0
      %v1326 = vadd.f32 %v1281, 1.0
      %v1327 = vadd.f32 %v1283, 1.0
      %v1328 = vadd.f32 %v1285, 1.0
      %v1329 = vadd.f32 %v1287, 1.0
      %v1330 = vadd.f32 %v1289, 1.0
      %v1331 = vadd.f32 %v1291, 1.0
      %v1332 = vadd.f32 %v1293, 1.0
      %v1333 = vadd.f32 %v1295, 1.0
      %v1334 = vadd.f32 %v1297, 1.0
      %v1335 = vadd.f32 %v1299, 1.0
      %v1336 = vadd.f32 %v1301, 1.0
      %v1337 = vadd.f32 %v1303, 1.0
      %v1338 = vadd.f32 %v1305, 1.0
      %v1339 = vadd.f32 %v1307, 1.0
      %v1340 = vrcp.pop %v1308
      %v1341 = vrcp.pop %v1309
      %v1342 = vrcp.pop %v1310
      %v1343 = vrcp.pop %v1311
      %v1344 = vrcp.pop %v1312
      %v1345 = vrcp.pop %v1313
      %v1346 = vrcp.pop %v1314
      %v1347 = vrcp.pop %v1315
      %v1348 = vrcp.pop %v1316
      %v1349 = vrcp.pop %v1317
      %v1350 = vrcp.pop %v1318
      %v1351 = vrcp.pop %v1319
      %v1352 = vrcp.pop %v1320
      %v1353 = vrcp.pop %v1321
      %v1354 = vrcp.pop %v1322
      %v1355 = vrcp.pop %v1323
      %v1356 = vrcp.pop %v1324
      %v1357 = vrcp.pop %v1325
      %v1358 = vrcp.pop %v1326
      %v1359 = vrcp.pop %v1327
      %v1360 = vrcp.pop %v1328
      %v1361 = vrcp.pop %v1329
      %v1362 = vrcp.pop %v1330
      %v1363 = vrcp.pop %v1331
      %v1364 = vrcp.pop %v1332
      %v1365 = vrcp.pop %v1333
      %v1366 = vrcp.pop %v1334
      %v1367 = vrcp.pop %v1335
      %v1368 = vrcp.pop %v1336
      %v1369 = vrcp.pop %v1337
      %v1370 = vrcp.pop %v1338
      %v1371 = vrcp.pop %v1339
      %v1372 = vmul.f32 %v1086, %v1340
      %v1373 = vmul.f32 %v1089, %v1341
      %v1374 = vmul.f32 %v1094, %v1342
      %v1375 = vmul.f32 %v1097, %v1343
      %v1376 = vmul.f32 %v1102, %v1344
      %v1377 = vmul.f32 %v1105, %v1345
      %v1378 = vmul.f32 %v1110, %v1346
      %v1379 = vmul.f32 %v1113, %v1347
      %v1380 = vmul.f32 %v1118, %v1348
      %v1381 = vmul.f32 %v1121, %v1349
      %v1382 = vmul.f32 %v1126, %v1350
      %v1383 = vmul.f32 %v1129, %v1351
      %v1384 = vmul.f32 %v1134, %v1352
      %v1385 = vmul.f32 %v1137, %v1353
      %v1386 = vmul.f32 %v1142, %v1354
      %v1387 = vmul.f32 %v1145, %v1355
      %v1388 = vmul.f32 %v1150, %v1356
      %v1389 = vmul.f32 %v1153, %v1357
      %v1390 = vmul.f32 %v1158, %v1358
      %v1391 = vmul.f32 %v1161, %v1359
      %v1392 = vmul.f32 %v1166, %v1360
      %v1393 = vmul.f32 %v1169, %v1361
      %v1394 = vmul.f32 %v1174, %v1362
      %v1395 = vmul.f32 %v1177, %v1363
      %v1396 = vmul.f32 %v1182, %v1364
      %v1397 = vmul.f32 %v1185, %v1365
      %v1398 = vmul.f32 %v1190, %v1366
      %v1399 = vmul.f32 %v1193, %v1367
      %v1400 = vmul.f32 %v1198, %v1368
      %v1401 = vmul.f32 %v1201, %v1369
      %v1402 = vmul.f32 %v1206, %v1370
      %v1403 = vmul.f32 %v1209, %v1371
      %v1404 = vld [vmem:[%s5] sm:$0xf]
      %v1405 = vld [vmem:[%s5 + $0x4] sm:$0xf]
      %v1406 = vld [vmem:[%s5 + $0x8] sm:$0xf]
      %v1407 = vld [vmem:[%s5 + $0xc] sm:$0xf]
      %v1408 = vld [vmem:[%s5 + $0x10] sm:$0xf]
      %v1409 = vld [vmem:[%s5 + $0x14] sm:$0xf]
      %v1410 = vld [vmem:[%s5 + $0x18] sm:$0xf]
      %v1411 = vld [vmem:[%s5 + $0x1c] sm:$0xf]
      %v1412 = vld [vmem:[%s5 + $0x20] sm:$0xf]
      %v1413 = vld [vmem:[%s5 + $0x24] sm:$0xf]
      %v1414 = vld [vmem:[%s5 + $0x28] sm:$0xf]
      %v1415 = vld [vmem:[%s5 + $0x2c] sm:$0xf]
      %v1416 = vld [vmem:[%s5 + $0x30] sm:$0xf]
      %v1417 = vld [vmem:[%s5 + $0x34] sm:$0xf]
      %v1418 = vld [vmem:[%s5 + $0x38] sm:$0xf]
      %v1419 = vld [vmem:[%s5 + $0x3c] sm:$0xf]
      %v1420 = vunpack.c.l.bf16 %v1404
      %v1421 = vunpack.c.l.bf16 %v1405
      %v1422 = vunpack.c.l.bf16 %v1406
      %v1423 = vunpack.c.l.bf16 %v1407
      %v1424 = vunpack.c.l.bf16 %v1408
      %v1425 = vunpack.c.l.bf16 %v1409
      %v1426 = vunpack.c.l.bf16 %v1410
      %v1427 = vunpack.c.l.bf16 %v1411
      %v1428 = vunpack.c.l.bf16 %v1412
      %v1429 = vunpack.c.l.bf16 %v1413
      %v1430 = vunpack.c.l.bf16 %v1414
      %v1431 = vunpack.c.l.bf16 %v1415
      %v1432 = vunpack.c.l.bf16 %v1416
      %v1433 = vunpack.c.l.bf16 %v1417
      %v1434 = vunpack.c.l.bf16 %v1418
      %v1435 = vunpack.c.l.bf16 %v1419
      %v1436 = vld [vmem:[%s6] sm:$0xf]
      %v1437 = vld [vmem:[%s6 + $0x4] sm:$0xf]
      %v1438 = vld [vmem:[%s6 + $0x8] sm:$0xf]
      %v1439 = vld [vmem:[%s6 + $0xc] sm:$0xf]
      %v1440 = vld [vmem:[%s6 + $0x10] sm:$0xf]
      %v1441 = vld [vmem:[%s6 + $0x14] sm:$0xf]
      %v1442 = vld [vmem:[%s6 + $0x18] sm:$0xf]
      %v1443 = vld [vmem:[%s6 + $0x1c] sm:$0xf]
      %v1444 = vld [vmem:[%s6 + $0x20] sm:$0xf]
      %v1445 = vld [vmem:[%s6 + $0x24] sm:$0xf]
      %v1446 = vld [vmem:[%s6 + $0x28] sm:$0xf]
      %v1447 = vld [vmem:[%s6 + $0x2c] sm:$0xf]
      %v1448 = vld [vmem:[%s6 + $0x30] sm:$0xf]
      %v1449 = vld [vmem:[%s6 + $0x34] sm:$0xf]
      %v1450 = vld [vmem:[%s6 + $0x38] sm:$0xf]
      %v1451 = vld [vmem:[%s6 + $0x3c] sm:$0xf]
      %v1452 = vunpack.c.l.bf16 %v1436
      %v1453 = vunpack.c.l.bf16 %v1437
      %v1454 = vunpack.c.l.bf16 %v1438
      %v1455 = vunpack.c.l.bf16 %v1439
      %v1456 = vunpack.c.l.bf16 %v1440
      %v1457 = vunpack.c.l.bf16 %v1441
      %v1458 = vunpack.c.l.bf16 %v1442
      %v1459 = vunpack.c.l.bf16 %v1443
      %v1460 = vunpack.c.l.bf16 %v1444
      %v1461 = vunpack.c.l.bf16 %v1445
      %v1462 = vunpack.c.l.bf16 %v1446
      %v1463 = vunpack.c.l.bf16 %v1447
      %v1464 = vunpack.c.l.bf16 %v1448
      %v1465 = vunpack.c.l.bf16 %v1449
      %v1466 = vunpack.c.l.bf16 %v1450
      %v1467 = vunpack.c.l.bf16 %v1451
      %v1468 = vld [vmem:[%s7] sm:$0xff]
      %v1469 = vld [vmem:[%s7 + $0x8] sm:$0xff]
      %v1470 = vld [vmem:[%s7 + $0x10] sm:$0xff]
      %v1471 = vld [vmem:[%s7 + $0x18] sm:$0xff]
      %v1472 = vld [vmem:[%s7 + $0x20] sm:$0xff]
      %v1473 = vld [vmem:[%s7 + $0x28] sm:$0xff]
      %v1474 = vld [vmem:[%s7 + $0x30] sm:$0xff]
      %v1475 = vld [vmem:[%s7 + $0x38] sm:$0xff]
      %v1476 = vld [vmem:[%s7 + $0x40] sm:$0xff]
      %v1477 = vld [vmem:[%s7 + $0x48] sm:$0xff]
      %v1478 = vld [vmem:[%s7 + $0x50] sm:$0xff]
      %v1479 = vld [vmem:[%s7 + $0x58] sm:$0xff]
      %v1480 = vld [vmem:[%s7 + $0x60] sm:$0xff]
      %v1481 = vld [vmem:[%s7 + $0x68] sm:$0xff]
      %v1482 = vld [vmem:[%s7 + $0x70] sm:$0xff]
      %v1483 = vld [vmem:[%s7 + $0x78] sm:$0xff]
      %v1484 = vld [vmem:[%s8] sm:$0x1]
      %1486 = vset.pattern.permute.xlu0 0
      %1487 = vperm.xlu0 %1486, %v1468
      %v1488 = vpop.permute.xlu0 %1487
      %1491 = vset.pattern.permute.xlu0 0
      %1492 = vperm.xlu0 %1491, %v1469
      %v1493 = vpop.permute.xlu0 %1492
      %1496 = vset.pattern.permute.xlu0 0
      %1497 = vperm.xlu0 %1496, %v1470
      %v1498 = vpop.permute.xlu0 %1497
      %1501 = vset.pattern.permute.xlu0 0
      %1502 = vperm.xlu0 %1501, %v1471
      %v1503 = vpop.permute.xlu0 %1502
      %1506 = vset.pattern.permute.xlu0 0
      %1507 = vperm.xlu0 %1506, %v1472
      %v1508 = vpop.permute.xlu0 %1507
      %1511 = vset.pattern.permute.xlu0 0
      %1512 = vperm.xlu0 %1511, %v1473
      %v1513 = vpop.permute.xlu0 %1512
      %1516 = vset.pattern.permute.xlu0 0
      %1517 = vperm.xlu0 %1516, %v1474
      %v1518 = vpop.permute.xlu0 %1517
      %1521 = vset.pattern.permute.xlu0 0
      %1522 = vperm.xlu0 %1521, %v1475
      %v1523 = vpop.permute.xlu0 %1522
      %1526 = vset.pattern.permute.xlu0 0
      %1527 = vperm.xlu0 %1526, %v1476
      %v1528 = vpop.permute.xlu0 %1527
      %1531 = vset.pattern.permute.xlu0 0
      %1532 = vperm.xlu0 %1531, %v1477
      %v1533 = vpop.permute.xlu0 %1532
      %1536 = vset.pattern.permute.xlu0 0
      %1537 = vperm.xlu0 %1536, %v1478
      %v1538 = vpop.permute.xlu0 %1537
      %1541 = vset.pattern.permute.xlu0 0
      %1542 = vperm.xlu0 %1541, %v1479
      %v1543 = vpop.permute.xlu0 %1542
      %1546 = vset.pattern.permute.xlu0 0
      %1547 = vperm.xlu0 %1546, %v1480
      %v1548 = vpop.permute.xlu0 %1547
      %1551 = vset.pattern.permute.xlu0 0
      %1552 = vperm.xlu0 %1551, %v1481
      %v1553 = vpop.permute.xlu0 %1552
      %1556 = vset.pattern.permute.xlu0 0
      %1557 = vperm.xlu0 %1556, %v1482
      %v1558 = vpop.permute.xlu0 %1557
      %1561 = vset.pattern.permute.xlu0 0
      %1562 = vperm.xlu0 %1561, %v1483
      %v1563 = vpop.permute.xlu0 %1562
      %v1566 = vlaneseq
      %v1567 = vshrl.u32 %v1566, 7
      %v1568 = vsub.s32 0, %v1567
      %v1569 = vrot.slane %v1484, %v1568
      %v1571 = vmul.f32 %v1488, %v1569
      %v1572 = vmul.f32 %v1493, %v1569
      %v1573 = vmul.f32 %v1498, %v1569
      %v1574 = vmul.f32 %v1503, %v1569
      %v1575 = vmul.f32 %v1508, %v1569
      %v1576 = vmul.f32 %v1513, %v1569
      %v1577 = vmul.f32 %v1518, %v1569
      %v1578 = vmul.f32 %v1523, %v1569
      %v1579 = vmul.f32 %v1528, %v1569
      %v1580 = vmul.f32 %v1533, %v1569
      %v1581 = vmul.f32 %v1538, %v1569
      %v1582 = vmul.f32 %v1543, %v1569
      %v1583 = vmul.f32 %v1548, %v1569
      %v1584 = vmul.f32 %v1553, %v1569
      %v1585 = vmul.f32 %v1558, %v1569
      %v1586 = vmul.f32 %v1563, %v1569
      %v1587 = vmul.f32 %v1452, %v1571
      %v1588 = vmul.f32 %v1453, %v1572
      %v1589 = vmul.f32 %v1454, %v1573
      %v1590 = vmul.f32 %v1455, %v1574
      %v1591 = vmul.f32 %v1456, %v1575
      %v1592 = vmul.f32 %v1457, %v1576
      %v1593 = vmul.f32 %v1458, %v1577
      %v1594 = vmul.f32 %v1459, %v1578
      %v1595 = vmul.f32 %v1460, %v1579
      %v1596 = vmul.f32 %v1461, %v1580
      %v1597 = vmul.f32 %v1462, %v1581
      %v1598 = vmul.f32 %v1463, %v1582
      %v1599 = vmul.f32 %v1464, %v1583
      %v1600 = vmul.f32 %v1465, %v1584
      %v1601 = vmul.f32 %v1466, %v1585
      %v1602 = vmul.f32 %v1467, %v1586
      %v1603 = vadd.f32 %v1420, %v1587
      %v1604 = vadd.f32 %v1421, %v1588
      %v1605 = vadd.f32 %v1422, %v1589
      %v1606 = vadd.f32 %v1423, %v1590
      %v1607 = vadd.f32 %v1424, %v1591
      %v1608 = vadd.f32 %v1425, %v1592
      %v1609 = vadd.f32 %v1426, %v1593
      %v1610 = vadd.f32 %v1427, %v1594
      %v1611 = vadd.f32 %v1428, %v1595
      %v1612 = vadd.f32 %v1429, %v1596
      %v1613 = vadd.f32 %v1430, %v1597
      %v1614 = vadd.f32 %v1431, %v1598
      %v1615 = vadd.f32 %v1432, %v1599
      %v1616 = vadd.f32 %v1433, %v1600
      %v1617 = vadd.f32 %v1434, %v1601
      %v1618 = vadd.f32 %v1435, %v1602
      %v1619 = vpack.c.bf16 %v1604, %v1603
      %v1620 = vpack.c.bf16 %v1606, %v1605
      %v1621 = vpack.c.bf16 %v1608, %v1607
      %v1622 = vpack.c.bf16 %v1610, %v1609
      %v1623 = vpack.c.bf16 %v1612, %v1611
      %v1624 = vpack.c.bf16 %v1614, %v1613
      %v1625 = vpack.c.bf16 %v1616, %v1615
      %v1626 = vpack.c.bf16 %v1618, %v1617
      %v1627 = vpack.c.bf16 %v1373, %v1372
      %v1628 = vpack.c.bf16 %v1375, %v1374
      %v1629 = vpack.c.bf16 %v1377, %v1376
      %v1630 = vpack.c.bf16 %v1379, %v1378
      %v1631 = vpack.c.bf16 %v1381, %v1380
      %v1632 = vpack.c.bf16 %v1383, %v1382
      %v1633 = vpack.c.bf16 %v1385, %v1384
      %v1634 = vpack.c.bf16 %v1387, %v1386
      %v1635 = vpack.c.bf16 %v1389, %v1388
      %v1636 = vpack.c.bf16 %v1391, %v1390
      %v1637 = vpack.c.bf16 %v1393, %v1392
      %v1638 = vpack.c.bf16 %v1395, %v1394
      %v1639 = vpack.c.bf16 %v1397, %v1396
      %v1640 = vpack.c.bf16 %v1399, %v1398
      %v1641 = vpack.c.bf16 %v1401, %v1400
      %v1642 = vpack.c.bf16 %v1403, %v1402
      %v1643 = vld [vmem:[%s9] sm:$0x1]
      %v1645 = vlaneseq
      %v1646 = vshrl.u32 %v1645, 7
      %v1647 = vsub.s32 0, %v1646
      %v1648 = vrot.slane %v1643, %v1647
      %1650 = vmatprep.subr.bf16.mxu0 0
      %1651 = vmatpush1.bf16.msra.mxu0 %v1619
      %1652 = vmatprep.subr.bf16.mxu0 0
      %1653 = vmatpush1.bf16.msra.mxu0 %v1620
      %1654 = vmatprep.subr.bf16.mxu0 0
      %1655 = vmatpush1.bf16.msra.mxu0 %v1621
      %1656 = vmatprep.subr.bf16.mxu0 0
      %1657 = vmatpush1.bf16.msra.mxu0 %v1622
      %1658 = vmatprep.subr.bf16.mxu0 0
      %1659 = vmatpush1.bf16.msra.mxu0 %v1623
      %1660 = vmatprep.subr.bf16.mxu0 0
      %1661 = vmatpush1.bf16.msra.mxu0 %v1624
      %1662 = vmatprep.subr.bf16.mxu0 0
      %1663 = vmatpush1.bf16.msra.mxu0 %v1625
      %1664 = vmatprep.subr.bf16.mxu0 0
      %1665 = vmatpush1.bf16.msra.mxu0 %v1626
      %1666 = vmatprep.subr.bf16.mxu0 0
      %1667 = vmatpush1.bf16.msra.mxu0 0
      %1668 = vmatprep.subr.bf16.mxu0 0
      %1669 = vmatpush1.bf16.msra.mxu0 0
      %1670 = vmatprep.subr.bf16.mxu0 0
      %1671 = vmatpush1.bf16.msra.mxu0 0
      %1672 = vmatprep.subr.bf16.mxu0 0
      %1673 = vmatpush1.bf16.msra.mxu0 0
      %1674 = vmatprep.subr.bf16.mxu0 0
      %1675 = vmatpush1.bf16.msra.mxu0 0
      %1676 = vmatprep.subr.bf16.mxu0 0
      %1677 = vmatpush1.bf16.msra.mxu0 0
      %1678 = vmatprep.subr.bf16.mxu0 0
      %1679 = vmatpush1.bf16.msra.mxu0 0
      %1680 = vmatprep.subr.bf16.mxu0 0
      %1681 = vmatpush1.bf16.msra.mxu0 0
      %1682 = vmatprep.mubr.bf16.mxu0 0
      %1683 = vmatmul.mubr.bf16.gmra.mrb[0].mxu0 %v1627
      %v1684 = vpop.f32.mrb[0].mxu0
      %v1685 = vadd.f32 %v1648, %v1684
      %v1686 = vpop.f32.mrb[0].mxu0
      %v1687 = vpop.f32.mrb[0].mxu0
      %v1688 = vadd.f32 %v1648, %v1687
      %v1689 = vpop.f32.mrb[0].mxu0
      %1690 = vmatprep.mubr.bf16.mxu0 0
      %1691 = vmatmul.mubr.bf16.gmra.mrb[0].mxu0 %v1628
      %v1692 = vpop.f32.mrb[0].mxu0
      %v1693 = vadd.f32 %v1648, %v1692
      %v1694 = vpop.f32.mrb[0].mxu0
      %v1695 = vpop.f32.mrb[0].mxu0
      %v1696 = vadd.f32 %v1648, %v1695
      %v1697 = vpop.f32.mrb[0].mxu0
      %1698 = vmatprep.mubr.bf16.mxu0 0
      %1699 = vmatmul.mubr.bf16.gmra.mrb[0].mxu0 %v1629
      %v1700 = vpop.f32.mrb[0].mxu0
      %v1701 = vadd.f32 %v1648, %v1700
      %v1702 = vpop.f32.mrb[0].mxu0
      %v1703 = vpop.f32.mrb[0].mxu0
      %v1704 = vadd.f32 %v1648, %v1703
      %v1705 = vpop.f32.mrb[0].mxu0
      %1706 = vmatprep.mubr.bf16.mxu0 0
      %1707 = vmatmul.mubr.bf16.gmra.mrb[0].mxu0 %v1630
      %v1708 = vpop.f32.mrb[0].mxu0
      %v1709 = vadd.f32 %v1648, %v1708
      %v1710 = vpop.f32.mrb[0].mxu0
      %v1711 = vpop.f32.mrb[0].mxu0
      %v1712 = vadd.f32 %v1648, %v1711
      %v1713 = vpop.f32.mrb[0].mxu0
      %1714 = vmatprep.mubr.bf16.mxu0 0
      %1715 = vmatmul.mubr.bf16.gmra.mrb[0].mxu0 %v1631
      %v1716 = vpop.f32.mrb[0].mxu0
      %v1717 = vadd.f32 %v1648, %v1716
      %v1718 = vpop.f32.mrb[0].mxu0
      %v1719 = vpop.f32.mrb[0].mxu0
      %v1720 = vadd.f32 %v1648, %v1719
      %v1721 = vpop.f32.mrb[0].mxu0
      %1722 = vmatprep.mubr.bf16.mxu0 0
      %1723 = vmatmul.mubr.bf16.gmra.mrb[0].mxu0 %v1632
      %v1724 = vpop.f32.mrb[0].mxu0
      %v1725 = vadd.f32 %v1648, %v1724
      %v1726 = vpop.f32.mrb[0].mxu0
      %v1727 = vpop.f32.mrb[0].mxu0
      %v1728 = vadd.f32 %v1648, %v1727
      %v1729 = vpop.f32.mrb[0].mxu0
      %1730 = vmatprep.mubr.bf16.mxu0 0
      %1731 = vmatmul.mubr.bf16.gmra.mrb[0].mxu0 %v1633
      %v1732 = vpop.f32.mrb[0].mxu0
      %v1733 = vadd.f32 %v1648, %v1732
      %v1734 = vpop.f32.mrb[0].mxu0
      %v1735 = vpop.f32.mrb[0].mxu0
      %v1736 = vadd.f32 %v1648, %v1735
      %v1737 = vpop.f32.mrb[0].mxu0
      %1738 = vmatprep.mubr.bf16.mxu0 0
      %1739 = vmatmul.mubr.bf16.gmra.mrb[0].mxu0 %v1634
      %v1740 = vpop.f32.mrb[0].mxu0
      %v1741 = vadd.f32 %v1648, %v1740
      %v1742 = vpop.f32.mrb[0].mxu0
      %v1743 = vpop.f32.mrb[0].mxu0
      %v1744 = vadd.f32 %v1648, %v1743
      %v1745 = vpop.f32.mrb[0].mxu0
      %1746 = vmatprep.mubr.bf16.mxu0 0
      %1747 = vmatmul.mubr.bf16.gmra.mrb[0].mxu0 %v1635
      %v1748 = vpop.f32.mrb[0].mxu0
      %v1749 = vadd.f32 %v1648, %v1748
      %v1750 = vpop.f32.mrb[0].mxu0
      %v1751 = vpop.f32.mrb[0].mxu0
      %v1752 = vadd.f32 %v1648, %v1751
      %v1753 = vpop.f32.mrb[0].mxu0
      %1754 = vmatprep.mubr.bf16.mxu0 0
      %1755 = vmatmul.mubr.bf16.gmra.mrb[0].mxu0 %v1636
      %v1756 = vpop.f32.mrb[0].mxu0
      %v1757 = vadd.f32 %v1648, %v1756
      %v1758 = vpop.f32.mrb[0].mxu0
      %v1759 = vpop.f32.mrb[0].mxu0
      %v1760 = vadd.f32 %v1648, %v1759
      %v1761 = vpop.f32.mrb[0].mxu0
      %1762 = vmatprep.mubr.bf16.mxu0 0
      %1763 = vmatmul.mubr.bf16.gmra.mrb[0].mxu0 %v1637
      %v1764 = vpop.f32.mrb[0].mxu0
      %v1765 = vadd.f32 %v1648, %v1764
      %v1766 = vpop.f32.mrb[0].mxu0
      %v1767 = vpop.f32.mrb[0].mxu0
      %v1768 = vadd.f32 %v1648, %v1767
      %v1769 = vpop.f32.mrb[0].mxu0
      %1770 = vmatprep.mubr.bf16.mxu0 0
      %1771 = vmatmul.mubr.bf16.gmra.mrb[0].mxu0 %v1638
      %v1772 = vpop.f32.mrb[0].mxu0
      %v1773 = vadd.f32 %v1648, %v1772
      %v1774 = vpop.f32.mrb[0].mxu0
      %v1775 = vpop.f32.mrb[0].mxu0
      %v1776 = vadd.f32 %v1648, %v1775
      %v1777 = vpop.f32.mrb[0].mxu0
      %1778 = vmatprep.mubr.bf16.mxu0 0
      %1779 = vmatmul.mubr.bf16.gmra.mrb[0].mxu0 %v1639
      %v1780 = vpop.f32.mrb[0].mxu0
      %v1781 = vadd.f32 %v1648, %v1780
      %v1782 = vpop.f32.mrb[0].mxu0
      %v1783 = vpop.f32.mrb[0].mxu0
      %v1784 = vadd.f32 %v1648, %v1783
      %v1785 = vpop.f32.mrb[0].mxu0
      %1786 = vmatprep.mubr.bf16.mxu0 0
      %1787 = vmatmul.mubr.bf16.gmra.mrb[0].mxu0 %v1640
      %v1788 = vpop.f32.mrb[0].mxu0
      %v1789 = vadd.f32 %v1648, %v1788
      %v1790 = vpop.f32.mrb[0].mxu0
      %v1791 = vpop.f32.mrb[0].mxu0
      %v1792 = vadd.f32 %v1648, %v1791
      %v1793 = vpop.f32.mrb[0].mxu0
      %1794 = vmatprep.mubr.bf16.mxu0 0
      %1795 = vmatmul.mubr.bf16.gmra.mrb[0].mxu0 %v1641
      %v1796 = vpop.f32.mrb[0].mxu0
      %v1797 = vadd.f32 %v1648, %v1796
      %v1798 = vpop.f32.mrb[0].mxu0
      %v1799 = vpop.f32.mrb[0].mxu0
      %v1800 = vadd.f32 %v1648, %v1799
      %v1801 = vpop.f32.mrb[0].mxu0
      %1802 = vmatprep.mubr.bf16.mxu0 0
      %1803 = vmatmul.mubr.bf16.gmra.mrb[0].mxu0 %v1642
      %v1804 = vpop.f32.mrb[0].mxu0
      %v1805 = vadd.f32 %v1648, %v1804
      %v1806 = vpop.f32.mrb[0].mxu0
      %v1807 = vpop.f32.mrb[0].mxu0
      %v1808 = vadd.f32 %v1648, %v1807
      %v1809 = vpop.f32.mrb[0].mxu0
      %1810 = vdwg.mxu0
      %v1811 = vmax.f32 %v1685, 0.0
      %v1812 = vmax.f32 %v1688, 0.0
      %v1813 = vmax.f32 %v1693, 0.0
      %v1814 = vmax.f32 %v1696, 0.0
      %v1815 = vmax.f32 %v1701, 0.0
      %v1816 = vmax.f32 %v1704, 0.0
      %v1817 = vmax.f32 %v1709, 0.0
      %v1818 = vmax.f32 %v1712, 0.0
      %v1819 = vmax.f32 %v1717, 0.0
      %v1820 = vmax.f32 %v1720, 0.0
      %v1821 = vmax.f32 %v1725, 0.0
      %v1822 = vmax.f32 %v1728, 0.0
      %v1823 = vmax.f32 %v1733, 0.0
      %v1824 = vmax.f32 %v1736, 0.0
      %v1825 = vmax.f32 %v1741, 0.0
      %v1826 = vmax.f32 %v1744, 0.0
      %v1827 = vmax.f32 %v1749, 0.0
      %v1828 = vmax.f32 %v1752, 0.0
      %v1829 = vmax.f32 %v1757, 0.0
      %v1830 = vmax.f32 %v1760, 0.0
      %v1831 = vmax.f32 %v1765, 0.0
      %v1832 = vmax.f32 %v1768, 0.0
      %v1833 = vmax.f32 %v1773, 0.0
      %v1834 = vmax.f32 %v1776, 0.0
      %v1835 = vmax.f32 %v1781, 0.0
      %v1836 = vmax.f32 %v1784, 0.0
      %v1837 = vmax.f32 %v1789, 0.0
      %v1838 = vmax.f32 %v1792, 0.0
      %v1839 = vmax.f32 %v1797, 0.0
      %v1840 = vmax.f32 %v1800, 0.0
      %v1841 = vmax.f32 %v1805, 0.0
      %v1842 = vmax.f32 %v1808, 0.0
      %v1843 = vld [vmem:[%s10] sm:$0xf]
      %v1844 = vld [vmem:[%s10 + $0x4] sm:$0xf]
      %v1845 = vld [vmem:[%s10 + $0x8] sm:$0xf]
      %v1846 = vld [vmem:[%s10 + $0xc] sm:$0xf]
      %v1847 = vld [vmem:[%s10 + $0x10] sm:$0xf]
      %v1848 = vld [vmem:[%s10 + $0x14] sm:$0xf]
      %v1849 = vld [vmem:[%s10 + $0x18] sm:$0xf]
      %v1850 = vld [vmem:[%s10 + $0x1c] sm:$0xf]
      %v1851 = vld [vmem:[%s10 + $0x20] sm:$0xf]
      %v1852 = vld [vmem:[%s10 + $0x24] sm:$0xf]
      %v1853 = vld [vmem:[%s10 + $0x28] sm:$0xf]
      %v1854 = vld [vmem:[%s10 + $0x2c] sm:$0xf]
      %v1855 = vld [vmem:[%s10 + $0x30] sm:$0xf]
      %v1856 = vld [vmem:[%s10 + $0x34] sm:$0xf]
      %v1857 = vld [vmem:[%s10 + $0x38] sm:$0xf]
      %v1858 = vld [vmem:[%s10 + $0x3c] sm:$0xf]
      %v1859 = vunpack.c.l.bf16 %v1843
      %v1860 = vunpack.c.l.bf16 %v1844
      %v1861 = vunpack.c.l.bf16 %v1845
      %v1862 = vunpack.c.l.bf16 %v1846
      %v1863 = vunpack.c.l.bf16 %v1847
      %v1864 = vunpack.c.l.bf16 %v1848
      %v1865 = vunpack.c.l.bf16 %v1849
      %v1866 = vunpack.c.l.bf16 %v1850
      %v1867 = vunpack.c.l.bf16 %v1851
      %v1868 = vunpack.c.l.bf16 %v1852
      %v1869 = vunpack.c.l.bf16 %v1853
      %v1870 = vunpack.c.l.bf16 %v1854
      %v1871 = vunpack.c.l.bf16 %v1855
      %v1872 = vunpack.c.l.bf16 %v1856
      %v1873 = vunpack.c.l.bf16 %v1857
      %v1874 = vunpack.c.l.bf16 %v1858
      %v1875 = vld [vmem:[%s11] sm:$0xf]
      %v1876 = vld [vmem:[%s11 + $0x4] sm:$0xf]
      %v1877 = vld [vmem:[%s11 + $0x8] sm:$0xf]
      %v1878 = vld [vmem:[%s11 + $0xc] sm:$0xf]
      %v1879 = vld [vmem:[%s11 + $0x10] sm:$0xf]
      %v1880 = vld [vmem:[%s11 + $0x14] sm:$0xf]
      %v1881 = vld [vmem:[%s11 + $0x18] sm:$0xf]
      %v1882 = vld [vmem:[%s11 + $0x1c] sm:$0xf]
      %v1883 = vld [vmem:[%s11 + $0x20] sm:$0xf]
      %v1884 = vld [vmem:[%s11 + $0x24] sm:$0xf]
      %v1885 = vld [vmem:[%s11 + $0x28] sm:$0xf]
      %v1886 = vld [vmem:[%s11 + $0x2c] sm:$0xf]
      %v1887 = vld [vmem:[%s11 + $0x30] sm:$0xf]
      %v1888 = vld [vmem:[%s11 + $0x34] sm:$0xf]
      %v1889 = vld [vmem:[%s11 + $0x38] sm:$0xf]
      %v1890 = vld [vmem:[%s11 + $0x3c] sm:$0xf]
      %v1891 = vunpack.c.l.bf16 %v1875
      %v1892 = vunpack.c.l.bf16 %v1876
      %v1893 = vunpack.c.l.bf16 %v1877
      %v1894 = vunpack.c.l.bf16 %v1878
      %v1895 = vunpack.c.l.bf16 %v1879
      %v1896 = vunpack.c.l.bf16 %v1880
      %v1897 = vunpack.c.l.bf16 %v1881
      %v1898 = vunpack.c.l.bf16 %v1882
      %v1899 = vunpack.c.l.bf16 %v1883
      %v1900 = vunpack.c.l.bf16 %v1884
      %v1901 = vunpack.c.l.bf16 %v1885
      %v1902 = vunpack.c.l.bf16 %v1886
      %v1903 = vunpack.c.l.bf16 %v1887
      %v1904 = vunpack.c.l.bf16 %v1888
      %v1905 = vunpack.c.l.bf16 %v1889
      %v1906 = vunpack.c.l.bf16 %v1890
      %v1907 = vld [vmem:[%s12] sm:$0xff]
      %v1908 = vld [vmem:[%s12 + $0x8] sm:$0xff]
      %v1909 = vld [vmem:[%s12 + $0x10] sm:$0xff]
      %v1910 = vld [vmem:[%s12 + $0x18] sm:$0xff]
      %v1911 = vld [vmem:[%s12 + $0x20] sm:$0xff]
      %v1912 = vld [vmem:[%s12 + $0x28] sm:$0xff]
      %v1913 = vld [vmem:[%s12 + $0x30] sm:$0xff]
      %v1914 = vld [vmem:[%s12 + $0x38] sm:$0xff]
      %v1915 = vld [vmem:[%s12 + $0x40] sm:$0xff]
      %v1916 = vld [vmem:[%s12 + $0x48] sm:$0xff]
      %v1917 = vld [vmem:[%s12 + $0x50] sm:$0xff]
      %v1918 = vld [vmem:[%s12 + $0x58] sm:$0xff]
      %v1919 = vld [vmem:[%s12 + $0x60] sm:$0xff]
      %v1920 = vld [vmem:[%s12 + $0x68] sm:$0xff]
      %v1921 = vld [vmem:[%s12 + $0x70] sm:$0xff]
      %v1922 = vld [vmem:[%s12 + $0x78] sm:$0xff]
      %v1923 = vld [vmem:[%s13] sm:$0x1]
      %1925 = vset.pattern.permute.xlu0 0
      %1926 = vperm.xlu0 %1925, %v1907
      %v1927 = vpop.permute.xlu0 %1926
      %1930 = vset.pattern.permute.xlu0 0
      %1931 = vperm.xlu0 %1930, %v1908
      %v1932 = vpop.permute.xlu0 %1931
      %1935 = vset.pattern.permute.xlu0 0
      %1936 = vperm.xlu0 %1935, %v1909
      %v1937 = vpop.permute.xlu0 %1936
      %1940 = vset.pattern.permute.xlu0 0
      %1941 = vperm.xlu0 %1940, %v1910
      %v1942 = vpop.permute.xlu0 %1941
      %1945 = vset.pattern.permute.xlu0 0
      %1946 = vperm.xlu0 %1945, %v1911
      %v1947 = vpop.permute.xlu0 %1946
      %1950 = vset.pattern.permute.xlu0 0
      %1951 = vperm.xlu0 %1950, %v1912
      %v1952 = vpop.permute.xlu0 %1951
      %1955 = vset.pattern.permute.xlu0 0
      %1956 = vperm.xlu0 %1955, %v1913
      %v1957 = vpop.permute.xlu0 %1956
      %1960 = vset.pattern.permute.xlu0 0
      %1961 = vperm.xlu0 %1960, %v1914
      %v1962 = vpop.permute.xlu0 %1961
      %1965 = vset.pattern.permute.xlu0 0
      %1966 = vperm.xlu0 %1965, %v1915
      %v1967 = vpop.permute.xlu0 %1966
      %1970 = vset.pattern.permute.xlu0 0
      %1971 = vperm.xlu0 %1970, %v1916
      %v1972 = vpop.permute.xlu0 %1971
      %1975 = vset.pattern.permute.xlu0 0
      %1976 = vperm.xlu0 %1975, %v1917
      %v1977 = vpop.permute.xlu0 %1976
      %1980 = vset.pattern.permute.xlu0 0
      %1981 = vperm.xlu0 %1980, %v1918
      %v1982 = vpop.permute.xlu0 %1981
      %1985 = vset.pattern.permute.xlu0 0
      %1986 = vperm.xlu0 %1985, %v1919
      %v1987 = vpop.permute.xlu0 %1986
      %1990 = vset.pattern.permute.xlu0 0
      %1991 = vperm.xlu0 %1990, %v1920
      %v1992 = vpop.permute.xlu0 %1991
      %1995 = vset.pattern.permute.xlu0 0
      %1996 = vperm.xlu0 %1995, %v1921
      %v1997 = vpop.permute.xlu0 %1996
      %2000 = vset.pattern.permute.xlu0 0
      %2001 = vperm.xlu0 %2000, %v1922
      %v2002 = vpop.permute.xlu0 %2001
      %v2005 = vlaneseq
      %v2006 = vshrl.u32 %v2005, 7
      %v2007 = vsub.s32 0, %v2006
      %v2008 = vrot.slane %v1923, %v2007
      %v2010 = vmul.f32 %v1927, %v2008
      %v2011 = vmul.f32 %v1932, %v2008
      %v2012 = vmul.f32 %v1937, %v2008
      %v2013 = vmul.f32 %v1942, %v2008
      %v2014 = vmul.f32 %v1947, %v2008
      %v2015 = vmul.f32 %v1952, %v2008
      %v2016 = vmul.f32 %v1957, %v2008
      %v2017 = vmul.f32 %v1962, %v2008
      %v2018 = vmul.f32 %v1967, %v2008
      %v2019 = vmul.f32 %v1972, %v2008
      %v2020 = vmul.f32 %v1977, %v2008
      %v2021 = vmul.f32 %v1982, %v2008
      %v2022 = vmul.f32 %v1987, %v2008
      %v2023 = vmul.f32 %v1992, %v2008
      %v2024 = vmul.f32 %v1997, %v2008
      %v2025 = vmul.f32 %v2002, %v2008
      %v2026 = vmul.f32 %v1891, %v2010
      %v2027 = vmul.f32 %v1892, %v2011
      %v2028 = vmul.f32 %v1893, %v2012
      %v2029 = vmul.f32 %v1894, %v2013
      %v2030 = vmul.f32 %v1895, %v2014
      %v2031 = vmul.f32 %v1896, %v2015
      %v2032 = vmul.f32 %v1897, %v2016
      %v2033 = vmul.f32 %v1898, %v2017
      %v2034 = vmul.f32 %v1899, %v2018
      %v2035 = vmul.f32 %v1900, %v2019
      %v2036 = vmul.f32 %v1901, %v2020
      %v2037 = vmul.f32 %v1902, %v2021
      %v2038 = vmul.f32 %v1903, %v2022
      %v2039 = vmul.f32 %v1904, %v2023
      %v2040 = vmul.f32 %v1905, %v2024
      %v2041 = vmul.f32 %v1906, %v2025
      %v2042 = vadd.f32 %v1859, %v2026
      %v2043 = vadd.f32 %v1860, %v2027
      %v2044 = vadd.f32 %v1861, %v2028
      %v2045 = vadd.f32 %v1862, %v2029
      %v2046 = vadd.f32 %v1863, %v2030
      %v2047 = vadd.f32 %v1864, %v2031
      %v2048 = vadd.f32 %v1865, %v2032
      %v2049 = vadd.f32 %v1866, %v2033
      %v2050 = vadd.f32 %v1867, %v2034
      %v2051 = vadd.f32 %v1868, %v2035
      %v2052 = vadd.f32 %v1869, %v2036
      %v2053 = vadd.f32 %v1870, %v2037
      %v2054 = vadd.f32 %v1871, %v2038
      %v2055 = vadd.f32 %v1872, %v2039
      %v2056 = vadd.f32 %v1873, %v2040
      %v2057 = vadd.f32 %v1874, %v2041
      %v2058 = vpack.c.bf16 %v2043, %v2042
      %v2059 = vpack.c.bf16 %v2045, %v2044
      %v2060 = vpack.c.bf16 %v2047, %v2046
      %v2061 = vpack.c.bf16 %v2049, %v2048
      %v2062 = vpack.c.bf16 %v2051, %v2050
      %v2063 = vpack.c.bf16 %v2053, %v2052
      %v2064 = vpack.c.bf16 %v2055, %v2054
      %v2065 = vpack.c.bf16 %v2057, %v2056
      %v2066 = vpack.c.bf16 %v1812, %v1811
      %v2067 = vpack.c.bf16 %v1814, %v1813
      %v2068 = vpack.c.bf16 %v1816, %v1815
      %v2069 = vpack.c.bf16 %v1818, %v1817
      %v2070 = vpack.c.bf16 %v1820, %v1819
      %v2071 = vpack.c.bf16 %v1822, %v1821
      %v2072 = vpack.c.bf16 %v1824, %v1823
      %v2073 = vpack.c.bf16 %v1826, %v1825
      %v2074 = vpack.c.bf16 %v1828, %v1827
      %v2075 = vpack.c.bf16 %v1830, %v1829
      %v2076 = vpack.c.bf16 %v1832, %v1831
      %v2077 = vpack.c.bf16 %v1834, %v1833
      %v2078 = vpack.c.bf16 %v1836, %v1835
      %v2079 = vpack.c.bf16 %v1838, %v1837
      %v2080 = vpack.c.bf16 %v1840, %v1839
      %v2081 = vpack.c.bf16 %v1842, %v1841
      %v2082 = vld [vmem:[%s14] sm:$0x1]
      %v2084 = vlaneseq
      %v2085 = vshrl.u32 %v2084, 7
      %v2086 = vsub.s32 0, %v2085
      %v2087 = vrot.slane %v2082, %v2086
      %2089 = vmatprep.subr.bf16.mxu0 0
      %2090 = vmatpush1.bf16.msra.mxu0 %v2058
      %2091 = vmatprep.subr.bf16.mxu0 0
      %2092 = vmatpush1.bf16.msra.mxu0 %v2059
      %2093 = vmatprep.subr.bf16.mxu0 0
      %2094 = vmatpush1.bf16.msra.mxu0 %v2060
      %2095 = vmatprep.subr.bf16.mxu0 0
      %2096 = vmatpush1.bf16.msra.mxu0 %v2061
      %2097 = vmatprep.subr.bf16.mxu0 0
      %2098 = vmatpush1.bf16.msra.mxu0 %v2062
      %2099 = vmatprep.subr.bf16.mxu0 0
      %2100 = vmatpush1.bf16.msra.mxu0 %v2063
      %2101 = vmatprep.subr.bf16.mxu0 0
      %2102 = vmatpush1.bf16.msra.mxu0 %v2064
      %2103 = vmatprep.subr.bf16.mxu0 0
      %2104 = vmatpush1.bf16.msra.mxu0 %v2065
      %2105 = vmatprep.subr.bf16.mxu0 0
      %2106 = vmatpush1.bf16.msra.mxu0 0
      %2107 = vmatprep.subr.bf16.mxu0 0
      %2108 = vmatpush1.bf16.msra.mxu0 0
      %2109 = vmatprep.subr.bf16.mxu0 0
      %2110 = vmatpush1.bf16.msra.mxu0 0
      %2111 = vmatprep.subr.bf16.mxu0 0
      %2112 = vmatpush1.bf16.msra.mxu0 0
      %2113 = vmatprep.subr.bf16.mxu0 0
      %2114 = vmatpush1.bf16.msra.mxu0 0
      %2115 = vmatprep.subr.bf16.mxu0 0
      %2116 = vmatpush1.bf16.msra.mxu0 0
      %2117 = vmatprep.subr.bf16.mxu0 0
      %2118 = vmatpush1.bf16.msra.mxu0 0
      %2119 = vmatprep.subr.bf16.mxu0 0
      %2120 = vmatpush1.bf16.msra.mxu0 0
      %2121 = vmatprep.mubr.bf16.mxu0 0
      %2122 = vmatmul.mubr.bf16.gmra.mrb[0].mxu0 %v2066
      %v2123 = vpop.f32.mrb[0].mxu0
      %v2124 = vadd.f32 %v2087, %v2123
      %v2125 = vpop.f32.mrb[0].mxu0
      %v2126 = vpop.f32.mrb[0].mxu0
      %v2127 = vadd.f32 %v2087, %v2126
      %v2128 = vpop.f32.mrb[0].mxu0
      %2129 = vmatprep.mubr.bf16.mxu0 0
      %2130 = vmatmul.mubr.bf16.gmra.mrb[0].mxu0 %v2067
      %v2131 = vpop.f32.mrb[0].mxu0
      %v2132 = vadd.f32 %v2087, %v2131
      %v2133 = vpop.f32.mrb[0].mxu0
      %v2134 = vpop.f32.mrb[0].mxu0
      %v2135 = vadd.f32 %v2087, %v2134
      %v2136 = vpop.f32.mrb[0].mxu0
      %2137 = vmatprep.mubr.bf16.mxu0 0
      %2138 = vmatmul.mubr.bf16.gmra.mrb[0].mxu0 %v2068
      %v2139 = vpop.f32.mrb[0].mxu0
      %v2140 = vadd.f32 %v2087, %v2139
      %v2141 = vpop.f32.mrb[0].mxu0
      %v2142 = vpop.f32.mrb[0].mxu0
      %v2143 = vadd.f32 %v2087, %v2142
      %v2144 = vpop.f32.mrb[0].mxu0
      %2145 = vmatprep.mubr.bf16.mxu0 0
      %2146 = vmatmul.mubr.bf16.gmra.mrb[0].mxu0 %v2069
      %v2147 = vpop.f32.mrb[0].mxu0
      %v2148 = vadd.f32 %v2087, %v2147
      %v2149 = vpop.f32.mrb[0].mxu0
      %v2150 = vpop.f32.mrb[0].mxu0
      %v2151 = vadd.f32 %v2087, %v2150
      %v2152 = vpop.f32.mrb[0].mxu0
      %2153 = vmatprep.mubr.bf16.mxu0 0
      %2154 = vmatmul.mubr.bf16.gmra.mrb[0].mxu0 %v2070
      %v2155 = vpop.f32.mrb[0].mxu0
      %v2156 = vadd.f32 %v2087, %v2155
      %v2157 = vpop.f32.mrb[0].mxu0
      %v2158 = vpop.f32.mrb[0].mxu0
      %v2159 = vadd.f32 %v2087, %v2158
      %v2160 = vpop.f32.mrb[0].mxu0
      %2161 = vmatprep.mubr.bf16.mxu0 0
      %2162 = vmatmul.mubr.bf16.gmra.mrb[0].mxu0 %v2071
      %v2163 = vpop.f32.mrb[0].mxu0
      %v2164 = vadd.f32 %v2087, %v2163
      %v2165 = vpop.f32.mrb[0].mxu0
      %v2166 = vpop.f32.mrb[0].mxu0
      %v2167 = vadd.f32 %v2087, %v2166
      %v2168 = vpop.f32.mrb[0].mxu0
      %2169 = vmatprep.mubr.bf16.mxu0 0
      %2170 = vmatmul.mubr.bf16.gmra.mrb[0].mxu0 %v2072
      %v2171 = vpop.f32.mrb[0].mxu0
      %v2172 = vadd.f32 %v2087, %v2171
      %v2173 = vpop.f32.mrb[0].mxu0
      %v2174 = vpop.f32.mrb[0].mxu0
      %v2175 = vadd.f32 %v2087, %v2174
      %v2176 = vpop.f32.mrb[0].mxu0
      %2177 = vmatprep.mubr.bf16.mxu0 0
      %2178 = vmatmul.mubr.bf16.gmra.mrb[0].mxu0 %v2073
      %v2179 = vpop.f32.mrb[0].mxu0
      %v2180 = vadd.f32 %v2087, %v2179
      %v2181 = vpop.f32.mrb[0].mxu0
      %v2182 = vpop.f32.mrb[0].mxu0
      %v2183 = vadd.f32 %v2087, %v2182
      %v2184 = vpop.f32.mrb[0].mxu0
      %2185 = vmatprep.mubr.bf16.mxu0 0
      %2186 = vmatmul.mubr.bf16.gmra.mrb[0].mxu0 %v2074
      %v2187 = vpop.f32.mrb[0].mxu0
      %v2188 = vadd.f32 %v2087, %v2187
      %v2189 = vpop.f32.mrb[0].mxu0
      %v2190 = vpop.f32.mrb[0].mxu0
      %v2191 = vadd.f32 %v2087, %v2190
      %v2192 = vpop.f32.mrb[0].mxu0
      %2193 = vmatprep.mubr.bf16.mxu0 0
      %2194 = vmatmul.mubr.bf16.gmra.mrb[0].mxu0 %v2075
      %v2195 = vpop.f32.mrb[0].mxu0
      %v2196 = vadd.f32 %v2087, %v2195
      %v2197 = vpop.f32.mrb[0].mxu0
      %v2198 = vpop.f32.mrb[0].mxu0
      %v2199 = vadd.f32 %v2087, %v2198
      %v2200 = vpop.f32.mrb[0].mxu0
      %2201 = vmatprep.mubr.bf16.mxu0 0
      %2202 = vmatmul.mubr.bf16.gmra.mrb[0].mxu0 %v2076
      %v2203 = vpop.f32.mrb[0].mxu0
      %v2204 = vadd.f32 %v2087, %v2203
      %v2205 = vpop.f32.mrb[0].mxu0
      %v2206 = vpop.f32.mrb[0].mxu0
      %v2207 = vadd.f32 %v2087, %v2206
      %v2208 = vpop.f32.mrb[0].mxu0
      %2209 = vmatprep.mubr.bf16.mxu0 0
      %2210 = vmatmul.mubr.bf16.gmra.mrb[0].mxu0 %v2077
      %v2211 = vpop.f32.mrb[0].mxu0
      %v2212 = vadd.f32 %v2087, %v2211
      %v2213 = vpop.f32.mrb[0].mxu0
      %v2214 = vpop.f32.mrb[0].mxu0
      %v2215 = vadd.f32 %v2087, %v2214
      %v2216 = vpop.f32.mrb[0].mxu0
      %2217 = vmatprep.mubr.bf16.mxu0 0
      %2218 = vmatmul.mubr.bf16.gmra.mrb[0].mxu0 %v2078
      %v2219 = vpop.f32.mrb[0].mxu0
      %v2220 = vadd.f32 %v2087, %v2219
      %v2221 = vpop.f32.mrb[0].mxu0
      %v2222 = vpop.f32.mrb[0].mxu0
      %v2223 = vadd.f32 %v2087, %v2222
      %v2224 = vpop.f32.mrb[0].mxu0
      %2225 = vmatprep.mubr.bf16.mxu0 0
      %2226 = vmatmul.mubr.bf16.gmra.mrb[0].mxu0 %v2079
      %v2227 = vpop.f32.mrb[0].mxu0
      %v2228 = vadd.f32 %v2087, %v2227
      %v2229 = vpop.f32.mrb[0].mxu0
      %v2230 = vpop.f32.mrb[0].mxu0
      %v2231 = vadd.f32 %v2087, %v2230
      %v2232 = vpop.f32.mrb[0].mxu0
      %2233 = vmatprep.mubr.bf16.mxu0 0
      %2234 = vmatmul.mubr.bf16.gmra.mrb[0].mxu0 %v2080
      %v2235 = vpop.f32.mrb[0].mxu0
      %v2236 = vadd.f32 %v2087, %v2235
      %v2237 = vpop.f32.mrb[0].mxu0
      %v2238 = vpop.f32.mrb[0].mxu0
      %v2239 = vadd.f32 %v2087, %v2238
      %v2240 = vpop.f32.mrb[0].mxu0
      %2241 = vmatprep.mubr.bf16.mxu0 0
      %2242 = vmatmul.mubr.bf16.gmra.mrb[0].mxu0 %v2081
      %v2243 = vpop.f32.mrb[0].mxu0
      %v2244 = vadd.f32 %v2087, %v2243
      %v2245 = vpop.f32.mrb[0].mxu0
      %v2246 = vpop.f32.mrb[0].mxu0
      %v2247 = vadd.f32 %v2087, %v2246
      %v2248 = vpop.f32.mrb[0].mxu0
      %2249 = vdwg.mxu0
      %vm2250 = vcmask 31744
      %2251 = vst.msk [vmem:[%s496] sm:$0xff] %vm2250, %v2124
      %2252 = vst.msk [vmem:[%s496 + $0x8] sm:$0xff] %vm2250, %v2127
      %2253 = vst.msk [vmem:[%s496 + $0x10] sm:$0xff] %vm2250, %v2132
      %2254 = vst.msk [vmem:[%s496 + $0x18] sm:$0xff] %vm2250, %v2135
      %2255 = vst.msk [vmem:[%s496 + $0x20] sm:$0xff] %vm2250, %v2140
      %2256 = vst.msk [vmem:[%s496 + $0x28] sm:$0xff] %vm2250, %v2143
      %2257 = vst.msk [vmem:[%s496 + $0x30] sm:$0xff] %vm2250, %v2148
      %2258 = vst.msk [vmem:[%s496 + $0x38] sm:$0xff] %vm2250, %v2151
      %2259 = vst.msk [vmem:[%s496 + $0x40] sm:$0xff] %vm2250, %v2156
      %2260 = vst.msk [vmem:[%s496 + $0x48] sm:$0xff] %vm2250, %v2159
      %2261 = vst.msk [vmem:[%s496 + $0x50] sm:$0xff] %vm2250, %v2164
      %2262 = vst.msk [vmem:[%s496 + $0x58] sm:$0xff] %vm2250, %v2167
      %2263 = vst.msk [vmem:[%s496 + $0x60] sm:$0xff] %vm2250, %v2172
      %2264 = vst.msk [vmem:[%s496 + $0x68] sm:$0xff] %vm2250, %v2175
      %2265 = vst.msk [vmem:[%s496 + $0x70] sm:$0xff] %vm2250, %v2180
      %2266 = vst.msk [vmem:[%s496 + $0x78] sm:$0xff] %vm2250, %v2183
      %2267 = vst.msk [vmem:[%s496 + $0x80] sm:$0xff] %vm2250, %v2188
      %2268 = vst.msk [vmem:[%s496 + $0x88] sm:$0xff] %vm2250, %v2191
      %2269 = vst.msk [vmem:[%s496 + $0x90] sm:$0xff] %vm2250, %v2196
      %2270 = vst.msk [vmem:[%s496 + $0x98] sm:$0xff] %vm2250, %v2199
      %2271 = vst.msk [vmem:[%s496 + $0xa0] sm:$0xff] %vm2250, %v2204
      %2272 = vst.msk [vmem:[%s496 + $0xa8] sm:$0xff] %vm2250, %v2207
      %2273 = vst.msk [vmem:[%s496 + $0xb0] sm:$0xff] %vm2250, %v2212
      %2274 = vst.msk [vmem:[%s496 + $0xb8] sm:$0xff] %vm2250, %v2215
      %2275 = vst.msk [vmem:[%s496 + $0xc0] sm:$0xff] %vm2250, %v2220
      %2276 = vst.msk [vmem:[%s496 + $0xc8] sm:$0xff] %vm2250, %v2223
      %2277 = vst.msk [vmem:[%s496 + $0xd0] sm:$0xff] %vm2250, %v2228
      %2278 = vst.msk [vmem:[%s496 + $0xd8] sm:$0xff] %vm2250, %v2231
      %2279 = vst.msk [vmem:[%s496 + $0xe0] sm:$0xff] %vm2250, %v2236
      %2280 = vst.msk [vmem:[%s496 + $0xe8] sm:$0xff] %vm2250, %v2239
      %2281 = vst.msk [vmem:[%s496 + $0xf0] sm:$0xff] %vm2250, %v2244
      %2282 = vst.msk [vmem:[%s496 + $0xf8] sm:$0xff] %vm2250, %v2247
      %s2283 = smul.u32 32, %s26
      %p2284 = scmp.lt.s32.totalorder %s2283, 63
      %s2285 = scalar_select %p2284, %s2283, 63
      %s2286 = smul.addr %s2285, 8
      %s2287 = scalar_lea.vmem %s15, %s2286
      // Predicated region
      $region81: #{mlp_forward.1} parent=79 // pred_check
        %p2288 = pneg %p364
      $region82: #{mlp_forward.1} parent=79 // pred_check_branch
        %2290 = sbr.rel (%p2288) target = $region84
      $region83: #{mlp_forward.1} parent=79 // pred_region
        %s2291 = smul.u32 32, %s26
      $region84: #{mlp_forward.1} parent=79 // pred_fallthru
        _
    $region80: #{mlp_forward.1} parent=5 // pred_fallthru
      _
    %p2292 = scmp.le.s32.totalorder 2, %s21
    // Predicated region
    $region85: #{mlp_forward.1} parent=5 // pred_check
      %p2293 = pneg %p2292
    $region86: #{mlp_forward.1} parent=5 // pred_check_branch
      %2295 = sbr.rel (%p2293) target = $region88
    $region87: #{mlp_forward.1} parent=5 // pred_region
      %s2296 = ssub.s32 %s21, 2
      // Predicated region
      $region89: #{mlp_forward.1} parent=87 // pred_check
        %p2297 = pneg %p370
      $region90: #{mlp_forward.1} parent=87 // pred_check_branch
        %2299 = sbr.rel (%p2297) target = $region92
      $region91: #{mlp_forward.1} parent=87 // pred_region
        %s2300 = smul.u32 32, %s27
        %p2301 = scmp.lt.s32.totalorder %s2300, 63
        %s2302 = scalar_select %p2301, %s2300, 63
        %s2303 = smul.addr %s2302, 8
        %s2304 = scalar_lea.vmem %s15, %s2303
      $region92: #{mlp_forward.1} parent=87 // pred_fallthru
        _
    $region88: #{mlp_forward.1} parent=5 // pred_fallthru
      _
  $region6: #{mlp_forward.1} parent=0 // loop_footer
    %s25 = sadd.s32 1, %s21
  $region7: #{mlp_forward.1} parent=0 // loop_footer_branch
    %20 = sbr.rel target = $region3
  $region8: #{mlp_forward.1} parent=0 // loop_exit
    _

</llo_original>
